<compile_context>
chip_gen: v7x
topology: tpu7x:2x2x1
jax: 0.10.0
libtpu: 0.0.40
codegen_flags: <defaults>
</compile_context>

<pallas_src>
import numpy as np
import jax
import jax.numpy as jnp
from jax.experimental import pallas as pl
from jax.experimental.pallas import tpu as pltpu

C_IN = 400        # fixed by the module
C_IN_PAD = 512    # conv1 contraction zero-padded to a multiple of 256 (MXU-friendly)
C_MID = 128       # fixed by the module
K = 5             # conv kernel size
PAD = 2           # 'same' padding for k=5, stride=1, dilation=1
LANE = 128


# ---- small in-kernel row-shift helpers (single-row sublane shifts, no big copies) ----
def _shift_down_clamp(a):   # out[m] = a[max(m-1, 0)]
    return jnp.concatenate([a[:1], a[:-1]], axis=0)


def _shift_up_clamp(a):     # out[m] = a[min(m+1, L-1)]
    return jnp.concatenate([a[1:], a[-1:]], axis=0)


def _shift_down_zero(a):    # out[m] = a[m-1]  (zero at m = 0)
    return jnp.concatenate([jnp.zeros_like(a[:1]), a[:-1]], axis=0)


def _shift_up_zero(a):      # out[m] = a[m+1]  (zero at m = L-1)
    return jnp.concatenate([a[1:], jnp.zeros_like(a[:1])], axis=0)


def iwpr_kernel(xp_ref, w1_ref, b1_ref, w2_ref, b2_ref, wl_ref, bl_ref, out_ref):
    # xp_ref : (1, L+4, 512)  bf16, halo- and channel-padded input (one batch row)
    # w1_ref : (K, 512, 128)  bf16      b1_ref: (1, 128)  f32
    # w2_ref : (K*128, 128)   bf16      b2_ref: (1, 128)  f32
    # wl_ref : (128, n_pad)   bf16      bl_ref: (1, n_pad) f32
    # out_ref: (1, 2, L, n_pad) f32  -- [:,0] = even time steps, [:,1] = odd time steps
    L = xp_ref.shape[1] - 2 * PAD

    xp = xp_ref[0]                                       # (L+4, 512) bf16

    # ---- Conv1d(400->128, k=5, 'same'): 5 shifted bf16 MXU matmuls, f32 acc ----
    y1 = jnp.dot(xp[0:L], w1_ref[0], preferred_element_type=jnp.float32)
    for t in range(1, K):
        y1 = y1 + jnp.dot(xp[t:t + L], w1_ref[t],
                          preferred_element_type=jnp.float32)
    y1 = y1 + b1_ref[...]                                # (L, 128) f32

    # ---- Upsample(x2, linear, align_corners=False), VPU only (no matmul) ----
    # up[2m]   = 0.75*y1[m] + 0.25*y1[max(m-1,0)]   (even phase)
    # up[2m+1] = 0.75*y1[m] + 0.25*y1[min(m+1,L-1)] (odd phase)
    even = 0.75 * y1 + 0.25 * _shift_down_clamp(y1)
    odd = 0.75 * y1 + 0.25 * _shift_up_clamp(y1)
    even_bf = even.astype(jnp.bfloat16)
    odd_bf = odd.astype(jnp.bfloat16)

    # ---- Conv1d(128->128, k=5, 'same') over the (virtually interleaved) 2L signal,
    #      written in polyphase form and merged into ONE (2L, 640) @ (640, 128) matmul:
    # y2[2m]   = even[m-1]@w2_0 + odd[m-1]@w2_1 + even[m]@w2_2 + odd[m]@w2_3 + even[m+1]@w2_4
    # y2[2m+1] = odd[m-1]@w2_0 + even[m]@w2_1 + odd[m]@w2_2 + even[m+1]@w2_3 + odd[m+1]@w2_4
    em1 = _shift_down_zero(even_bf)
    om1 = _shift_down_zero(odd_bf)
    ep1 = _shift_up_zero(even_bf)
    op1 = _shift_up_zero(odd_bf)
    cat_even = jnp.concatenate([em1, om1, even_bf, odd_bf, ep1], axis=-1)   # (L, 640)
    cat_odd = jnp.concatenate([om1, even_bf, odd_bf, ep1, op1], axis=-1)    # (L, 640)
    big = jnp.concatenate([cat_even, cat_odd], axis=0)                      # (2L, 640)
    y2 = jnp.dot(big, w2_ref[...], preferred_element_type=jnp.float32)
    y2 = y2 + b2_ref[...]                                                   # (2L, 128)

    # Dropout(p=0.5) is identity in eval-mode forward.

    # ---- Linear(128 -> n), zero-padded to a lane-dense width n_pad ----
    out = jnp.dot(y2.astype(jnp.bfloat16), wl_ref[...],
                  preferred_element_type=jnp.float32) + bl_ref[...]         # (2L, n_pad)

    out_ref[0, 0] = out[:L].astype(out_ref.dtype)    # even time steps (2m)
    out_ref[0, 1] = out[L:].astype(out_ref.dtype)    # odd time steps  (2m+1)


def iwpr_forward(x, w1, b1, w2, b2, wl, bl):
    """x: (B, L, 400) channels-last.  Returns (B, 2L, n) float32."""
    B, L, cin = x.shape
    assert cin == C_IN
    n = wl.shape[1]
    n_pad = ((n + LANE - 1) // LANE) * LANE
    Lp = L + 2 * PAD

    # Host-side prep: time halo, channel zero-pad 400->512, bf16-cast everything that
    # feeds the MXU, lane-pad the classifier with exact zeros.
    xp = jnp.pad(x, ((0, 0), (PAD, PAD), (0, C_IN_PAD - C_IN))).astype(jnp.bfloat16)
    w1p = jnp.pad(w1, ((0, 0), (0, C_IN_PAD - C_IN), (0, 0))).astype(jnp.bfloat16)
    w2m = w2.astype(jnp.bfloat16).reshape(K * C_MID, C_MID)      # merged-tap layout
    wlp = jnp.pad(wl, ((0, 0), (0, n_pad - n))).astype(jnp.bfloat16)
    blp = jnp.pad(bl, ((0, 0), (0, n_pad - n))).astype(jnp.float32)
    b1f = b1.astype(jnp.float32)
    b2f = b2.astype(jnp.float32)

    # Explicit scoped-VMEM budget (per-step blocks + resident weights + headroom).
    est = (Lp * C_IN_PAD * 2) * 2                        # bf16 input block, double-buffered
    est += (2 * L * n_pad * 4) * 2                       # f32 output block, double-buffered
    est += (K * C_IN_PAD * C_MID + K * C_MID * C_MID + C_MID * n_pad) * 2
    est += (2 * C_MID + n_pad) * 4
    est += 16 * 1024 * L                                 # generous bound on live intermediates
    vmem_limit = int(min(max(2 * est, 16 * 2**20), 64 * 2**20))

    vmem = pltpu.MemorySpace.VMEM
    out_p = pl.pallas_call(
        iwpr_kernel,
        out_shape=jax.ShapeDtypeStruct((B, 2, L, n_pad), jnp.float32),
        grid=(B,),
        in_specs=[
            pl.BlockSpec((1, Lp, C_IN_PAD), lambda i: (i, 0, 0)),   # x (pipelined per batch)
            pl.BlockSpec(memory_space=vmem),                        # w1 (resident, single copy)
            pl.BlockSpec(memory_space=vmem),                        # b1
            pl.BlockSpec(memory_space=vmem),                        # w2 (merged taps)
            pl.BlockSpec(memory_space=vmem),                        # b2
            pl.BlockSpec(memory_space=vmem),                        # wl (lane-padded)
            pl.BlockSpec(memory_space=vmem),                        # bl
        ],
        out_specs=pl.BlockSpec((1, 2, L, n_pad), lambda i: (i, 0, 0, 0)),
        compiler_params=pltpu.CompilerParams(
            dimension_semantics=("parallel",),
            vmem_limit_bytes=vmem_limit,
        ),
    )(xp, w1p, b1f, w2m, b2f, wlp, blp)

    # (B, 2, L, n_pad): axis 1 is the even/odd phase -> interleave in plain XLA outside
    # the kernel, then drop the lane padding.
    out = jnp.transpose(out_p, (0, 2, 1, 3)).reshape(B, 2 * L, n_pad)
    return out[:, :, :n]


def iwpr_reference(x, w1, b1, w2, b2, wl, bl):
    """Plain-JAX reference mirroring the kernel's bf16 rounding points."""
    B, L, _ = x.shape
    xb = x.astype(jnp.bfloat16)
    w1b = w1.astype(jnp.bfloat16)
    xpad = jnp.pad(xb, ((0, 0), (PAD, PAD), (0, 0)))
    y1 = sum(jnp.einsum('blc,cd->bld', xpad[:, t:t + L], w1b[t],
                        preferred_element_type=jnp.float32) for t in range(K))
    y1 = y1 + b1[0]

    # Upsample(scale=2, mode='linear', align_corners=False), half-pixel + edge clamp.
    prev = jnp.concatenate([y1[:, :1], y1[:, :-1]], axis=1)
    nxt = jnp.concatenate([y1[:, 1:], y1[:, -1:]], axis=1)
    even = 0.75 * y1 + 0.25 * prev
    odd = 0.75 * y1 + 0.25 * nxt
    up = jnp.stack([even, odd], axis=2).reshape(B, 2 * L, C_MID)

    ub = up.astype(jnp.bfloat16)
    w2b = w2.astype(jnp.bfloat16)
    upad = jnp.pad(ub, ((0, 0), (PAD, PAD), (0, 0)))
    y2 = sum(jnp.einsum('blc,cd->bld', upad[:, t:t + 2 * L], w2b[t],
                        preferred_element_type=jnp.float32) for t in range(K))
    y2 = y2 + b2[0]
    return jnp.einsum('blc,cn->bln', y2.astype(jnp.bfloat16), wl.astype(jnp.bfloat16),
                      preferred_element_type=jnp.float32) + bl[0]


if __name__ == "__main__":
    B, L, n = 2, 16, 8                                   # small synthetic shapes

    key = jax.random.PRNGKey(0)
    k = jax.random.split(key, 8)
    # Deterministic synthetic parameters (PyTorch-like fan-in scaling).
    w1 = jax.random.normal(k[0], (K, C_IN, C_MID), jnp.float32) / np.sqrt(C_IN * K)
    b1 = jax.random.normal(k[1], (1, C_MID), jnp.float32) * 0.01
    w2 = jax.random.normal(k[2], (K, C_MID, C_MID), jnp.float32) / np.sqrt(C_MID * K)
    b2 = jax.random.normal(k[3], (1, C_MID), jnp.float32) * 0.01
    wl = jax.random.normal(k[4], (C_MID, n), jnp.float32) / np.sqrt(C_MID)
    bl = jax.random.normal(k[5], (1, n), jnp.float32) * 0.01

    # Input: PyTorch f is (B, 400, L) NCW; kernel layout is channels-last (B, L, 400).
    x = jax.random.normal(k[6], (B, L, C_IN), jnp.float32)

    out = jax.block_until_ready(iwpr_forward(x, w1, b1, w2, b2, wl, bl))
    ref = jax.block_until_ready(iwpr_reference(x, w1, b1, w2, b2, wl, bl))

    assert out.shape == (B, 2 * L, n)
    assert bool(jnp.all(jnp.isfinite(out)))
    assert bool(jnp.allclose(out, ref, atol=1e-2, rtol=1e-2)), "mismatch vs reference"

    print("KERNEL_OK")
</pallas_src>

<mosaic_0001>
module attributes {stable_mosaic.version = 11 : i64} {
  func.func @iwpr_kernel(%arg0: i32, %arg1: memref<1x20x512xbf16, #tpu.memory_space<vmem>>, %arg2: memref<5x512x128xbf16, #tpu.memory_space<vmem>>, %arg3: memref<1x128xf32, #tpu.memory_space<vmem>>, %arg4: memref<640x128xbf16, #tpu.memory_space<vmem>>, %arg5: memref<1x128xf32, #tpu.memory_space<vmem>>, %arg6: memref<128x128xbf16, #tpu.memory_space<vmem>>, %arg7: memref<1x128xf32, #tpu.memory_space<vmem>>, %arg8: memref<1x2x16x128xf32, #tpu.memory_space<vmem>>) attributes {dimension_semantics = [#tpu.dimension_semantics<parallel>], iteration_bounds = array<i64: 2>, scalar_prefetch = 0 : i64, scratch_operands = 0 : i64, tpu.core_type = #tpu.core_type<tc>, window_params = [{transform_indices = @transform_0, window_bounds = array<i64: 1, 20, 512>}, {pipeline_mode = #tpu.pipeline_mode<synchronous>, transform_indices = @transform_1, window_bounds = array<i64: 5, 512, 128>}, {pipeline_mode = #tpu.pipeline_mode<synchronous>, transform_indices = @transform_2, window_bounds = array<i64: 1, 128>}, {pipeline_mode = #tpu.pipeline_mode<synchronous>, transform_indices = @transform_3, window_bounds = array<i64: 640, 128>}, {pipeline_mode = #tpu.pipeline_mode<synchronous>, transform_indices = @transform_4, window_bounds = array<i64: 1, 128>}, {pipeline_mode = #tpu.pipeline_mode<synchronous>, transform_indices = @transform_5, window_bounds = array<i64: 128, 128>}, {pipeline_mode = #tpu.pipeline_mode<synchronous>, transform_indices = @transform_6, window_bounds = array<i64: 1, 128>}, {transform_indices = @transform_7, window_bounds = array<i64: 1, 2, 16, 128>}]} {
    %c0 = arith.constant 0 : index
    %c0_0 = arith.constant 0 : index
    %c0_1 = arith.constant 0 : index
    %0 = vector.load %arg1[%c0, %c0_0, %c0_1] : memref<1x20x512xbf16, #tpu.memory_space<vmem>>, vector<1x20x512xbf16>
    %1 = vector.shape_cast %0 : vector<1x20x512xbf16> to vector<20x512xbf16>
    %2 = vector.extract_strided_slice %1 {offsets = [0, 0], sizes = [16, 512], strides = [1, 1]} : vector<20x512xbf16> to vector<16x512xbf16>
    %c0_2 = arith.constant 0 : index
    %c0_3 = arith.constant 0 : index
    %c0_4 = arith.constant 0 : index
    %3 = vector.load %arg2[%c0_2, %c0_3, %c0_4] : memref<5x512x128xbf16, #tpu.memory_space<vmem>>, vector<1x512x128xbf16>
    %4 = vector.shape_cast %3 : vector<1x512x128xbf16> to vector<512x128xbf16>
    %cst = arith.constant dense<0.000000e+00> : vector<16x128xf32>
    %5 = tpu.matmul %2, %4, %cst {dimension_numbers = #tpu.dot_dimension_numbers<[1], [0], [0], [1], [0, 0, 1, 1], [], []>} : vector<16x512xbf16>, vector<512x128xbf16>, vector<16x128xf32> -> vector<16x128xf32>
    %6 = vector.extract_strided_slice %1 {offsets = [1, 0], sizes = [16, 512], strides = [1, 1]} : vector<20x512xbf16> to vector<16x512xbf16>
    %c1 = arith.constant 1 : index
    %c0_5 = arith.constant 0 : index
    %c0_6 = arith.constant 0 : index
    %7 = vector.load %arg2[%c1, %c0_5, %c0_6] : memref<5x512x128xbf16, #tpu.memory_space<vmem>>, vector<1x512x128xbf16>
    %8 = vector.shape_cast %7 : vector<1x512x128xbf16> to vector<512x128xbf16>
    %cst_7 = arith.constant dense<0.000000e+00> : vector<16x128xf32>
    %9 = tpu.matmul %6, %8, %cst_7 {dimension_numbers = #tpu.dot_dimension_numbers<[1], [0], [0], [1], [0, 0, 1, 1], [], []>} : vector<16x512xbf16>, vector<512x128xbf16>, vector<16x128xf32> -> vector<16x128xf32>
    %10 = arith.addf %5, %9 : vector<16x128xf32>
    %11 = vector.extract_strided_slice %1 {offsets = [2, 0], sizes = [16, 512], strides = [1, 1]} : vector<20x512xbf16> to vector<16x512xbf16>
    %c2 = arith.constant 2 : index
    %c0_8 = arith.constant 0 : index
    %c0_9 = arith.constant 0 : index
    %12 = vector.load %arg2[%c2, %c0_8, %c0_9] : memref<5x512x128xbf16, #tpu.memory_space<vmem>>, vector<1x512x128xbf16>
    %13 = vector.shape_cast %12 : vector<1x512x128xbf16> to vector<512x128xbf16>
    %cst_10 = arith.constant dense<0.000000e+00> : vector<16x128xf32>
    %14 = tpu.matmul %11, %13, %cst_10 {dimension_numbers = #tpu.dot_dimension_numbers<[1], [0], [0], [1], [0, 0, 1, 1], [], []>} : vector<16x512xbf16>, vector<512x128xbf16>, vector<16x128xf32> -> vector<16x128xf32>
    %15 = arith.addf %10, %14 : vector<16x128xf32>
    %16 = vector.extract_strided_slice %1 {offsets = [3, 0], sizes = [16, 512], strides = [1, 1]} : vector<20x512xbf16> to vector<16x512xbf16>
    %c3 = arith.constant 3 : index
    %c0_11 = arith.constant 0 : index
    %c0_12 = arith.constant 0 : index
    %17 = vector.load %arg2[%c3, %c0_11, %c0_12] : memref<5x512x128xbf16, #tpu.memory_space<vmem>>, vector<1x512x128xbf16>
    %18 = vector.shape_cast %17 : vector<1x512x128xbf16> to vector<512x128xbf16>
    %cst_13 = arith.constant dense<0.000000e+00> : vector<16x128xf32>
    %19 = tpu.matmul %16, %18, %cst_13 {dimension_numbers = #tpu.dot_dimension_numbers<[1], [0], [0], [1], [0, 0, 1, 1], [], []>} : vector<16x512xbf16>, vector<512x128xbf16>, vector<16x128xf32> -> vector<16x128xf32>
    %20 = arith.addf %15, %19 : vector<16x128xf32>
    %21 = vector.extract_strided_slice %1 {offsets = [4, 0], sizes = [16, 512], strides = [1, 1]} : vector<20x512xbf16> to vector<16x512xbf16>
    %c4 = arith.constant 4 : index
    %c0_14 = arith.constant 0 : index
    %c0_15 = arith.constant 0 : index
    %22 = vector.load %arg2[%c4, %c0_14, %c0_15] : memref<5x512x128xbf16, #tpu.memory_space<vmem>>, vector<1x512x128xbf16>
    %23 = vector.shape_cast %22 : vector<1x512x128xbf16> to vector<512x128xbf16>
    %cst_16 = arith.constant dense<0.000000e+00> : vector<16x128xf32>
    %24 = tpu.matmul %21, %23, %cst_16 {dimension_numbers = #tpu.dot_dimension_numbers<[1], [0], [0], [1], [0, 0, 1, 1], [], []>} : vector<16x512xbf16>, vector<512x128xbf16>, vector<16x128xf32> -> vector<16x128xf32>
    %25 = arith.addf %20, %24 : vector<16x128xf32>
    %c0_17 = arith.constant 0 : index
    %c0_18 = arith.constant 0 : index
    %26 = vector.load %arg3[%c0_17, %c0_18] : memref<1x128xf32, #tpu.memory_space<vmem>>, vector<1x128xf32>
    %27 = vector.broadcast %26 : vector<1x128xf32> to vector<16x128xf32>
    %28 = arith.addf %25, %27 : vector<16x128xf32>
    %cst_19 = arith.constant 7.500000e-01 : f32
    %29 = vector.broadcast %cst_19 : f32 to vector<16x128xf32>
    %30 = arith.mulf %29, %28 : vector<16x128xf32>
    %31 = vector.extract_strided_slice %28 {offsets = [0, 0], sizes = [1, 128], strides = [1, 1]} : vector<16x128xf32> to vector<1x128xf32>
    %32 = vector.extract_strided_slice %28 {offsets = [0, 0], sizes = [15, 128], strides = [1, 1]} : vector<16x128xf32> to vector<15x128xf32>
    %33 = tpu.concatenate %31, %32 in 0 : vector<1x128xf32>, vector<15x128xf32> -> vector<16x128xf32>
    %cst_20 = arith.constant 2.500000e-01 : f32
    %34 = vector.broadcast %cst_20 : f32 to vector<16x128xf32>
    %35 = arith.mulf %34, %33 : vector<16x128xf32>
    %36 = arith.addf %30, %35 : vector<16x128xf32>
    %cst_21 = arith.constant 7.500000e-01 : f32
    %37 = vector.broadcast %cst_21 : f32 to vector<16x128xf32>
    %38 = arith.mulf %37, %28 : vector<16x128xf32>
    %39 = vector.extract_strided_slice %28 {offsets = [1, 0], sizes = [15, 128], strides = [1, 1]} : vector<16x128xf32> to vector<15x128xf32>
    %40 = vector.extract_strided_slice %28 {offsets = [15, 0], sizes = [1, 128], strides = [1, 1]} : vector<16x128xf32> to vector<1x128xf32>
    %41 = tpu.concatenate %39, %40 in 0 : vector<15x128xf32>, vector<1x128xf32> -> vector<16x128xf32>
    %cst_22 = arith.constant 2.500000e-01 : f32
    %42 = vector.broadcast %cst_22 : f32 to vector<16x128xf32>
    %43 = arith.mulf %42, %41 : vector<16x128xf32>
    %44 = arith.addf %38, %43 : vector<16x128xf32>
    %45 = arith.truncf %36 : vector<16x128xf32> to vector<16x128xbf16>
    %46 = arith.truncf %44 : vector<16x128xf32> to vector<16x128xbf16>
    %cst_23 = arith.constant 0.000000e+00 : bf16
    %47 = vector.broadcast %cst_23 : bf16 to vector<1x128xbf16>
    %48 = vector.extract_strided_slice %45 {offsets = [0, 0], sizes = [15, 128], strides = [1, 1]} : vector<16x128xbf16> to vector<15x128xbf16>
    %49 = tpu.concatenate %47, %48 in 0 : vector<1x128xbf16>, vector<15x128xbf16> -> vector<16x128xbf16>
    %cst_24 = arith.constant 0.000000e+00 : bf16
    %50 = vector.broadcast %cst_24 : bf16 to vector<1x128xbf16>
    %51 = vector.extract_strided_slice %46 {offsets = [0, 0], sizes = [15, 128], strides = [1, 1]} : vector<16x128xbf16> to vector<15x128xbf16>
    %52 = tpu.concatenate %50, %51 in 0 : vector<1x128xbf16>, vector<15x128xbf16> -> vector<16x128xbf16>
    %53 = vector.extract_strided_slice %45 {offsets = [1, 0], sizes = [15, 128], strides = [1, 1]} : vector<16x128xbf16> to vector<15x128xbf16>
    %cst_25 = arith.constant 0.000000e+00 : bf16
    %54 = vector.broadcast %cst_25 : bf16 to vector<1x128xbf16>
    %55 = tpu.concatenate %53, %54 in 0 : vector<15x128xbf16>, vector<1x128xbf16> -> vector<16x128xbf16>
    %56 = vector.extract_strided_slice %46 {offsets = [1, 0], sizes = [15, 128], strides = [1, 1]} : vector<16x128xbf16> to vector<15x128xbf16>
    %cst_26 = arith.constant 0.000000e+00 : bf16
    %57 = vector.broadcast %cst_26 : bf16 to vector<1x128xbf16>
    %58 = tpu.concatenate %56, %57 in 0 : vector<15x128xbf16>, vector<1x128xbf16> -> vector<16x128xbf16>
    %59 = tpu.concatenate %49, %52, %45, %46, %55 in 1 : vector<16x128xbf16>, vector<16x128xbf16>, vector<16x128xbf16>, vector<16x128xbf16>, vector<16x128xbf16> -> vector<16x640xbf16>
    %60 = tpu.concatenate %52, %45, %46, %55, %58 in 1 : vector<16x128xbf16>, vector<16x128xbf16>, vector<16x128xbf16>, vector<16x128xbf16>, vector<16x128xbf16> -> vector<16x640xbf16>
    %61 = tpu.concatenate %59, %60 in 0 : vector<16x640xbf16>, vector<16x640xbf16> -> vector<32x640xbf16>
    %c0_27 = arith.constant 0 : index
    %c0_28 = arith.constant 0 : index
    %62 = vector.load %arg4[%c0_27, %c0_28] : memref<640x128xbf16, #tpu.memory_space<vmem>>, vector<640x128xbf16>
    %cst_29 = arith.constant dense<0.000000e+00> : vector<32x128xf32>
    %63 = tpu.matmul %61, %62, %cst_29 {dimension_numbers = #tpu.dot_dimension_numbers<[1], [0], [0], [1], [0, 0, 1, 1], [], []>} : vector<32x640xbf16>, vector<640x128xbf16>, vector<32x128xf32> -> vector<32x128xf32>
    %c0_30 = arith.constant 0 : index
    %c0_31 = arith.constant 0 : index
    %64 = vector.load %arg5[%c0_30, %c0_31] : memref<1x128xf32, #tpu.memory_space<vmem>>, vector<1x128xf32>
    %65 = vector.broadcast %64 : vector<1x128xf32> to vector<32x128xf32>
    %66 = arith.addf %63, %65 : vector<32x128xf32>
    %67 = arith.truncf %66 : vector<32x128xf32> to vector<32x128xbf16>
    %c0_32 = arith.constant 0 : index
    %c0_33 = arith.constant 0 : index
    %68 = vector.load %arg6[%c0_32, %c0_33] : memref<128x128xbf16, #tpu.memory_space<vmem>>, vector<128x128xbf16>
    %cst_34 = arith.constant dense<0.000000e+00> : vector<32x128xf32>
    %69 = tpu.matmul %67, %68, %cst_34 {dimension_numbers = #tpu.dot_dimension_numbers<[1], [0], [0], [1], [0, 0, 1, 1], [], []>} : vector<32x128xbf16>, vector<128x128xbf16>, vector<32x128xf32> -> vector<32x128xf32>
    %c0_35 = arith.constant 0 : index
    %c0_36 = arith.constant 0 : index
    %70 = vector.load %arg7[%c0_35, %c0_36] : memref<1x128xf32, #tpu.memory_space<vmem>>, vector<1x128xf32>
    %71 = vector.broadcast %70 : vector<1x128xf32> to vector<32x128xf32>
    %72 = arith.addf %69, %71 : vector<32x128xf32>
    %73 = vector.extract_strided_slice %72 {offsets = [0, 0], sizes = [16, 128], strides = [1, 1]} : vector<32x128xf32> to vector<16x128xf32>
    %c0_37 = arith.constant 0 : index
    %c0_38 = arith.constant 0 : index
    %c0_39 = arith.constant 0 : index
    %c0_40 = arith.constant 0 : index
    %74 = vector.load %arg8[%c0_37, %c0_38, %c0_39, %c0_40] : memref<1x2x16x128xf32, #tpu.memory_space<vmem>>, vector<1x1x16x128xf32>
    %75 = vector.shape_cast %74 : vector<1x1x16x128xf32> to vector<16x128xf32>
    %76 = vector.shape_cast %73 : vector<16x128xf32> to vector<1x1x16x128xf32>
    tpu.vector_store %arg8[%c0_37, %c0_38, %c0_39, %c0_40], %76 {strides = array<i32>} : memref<1x2x16x128xf32, #tpu.memory_space<vmem>>, vector<1x1x16x128xf32>,
    %77 = vector.extract_strided_slice %72 {offsets = [16, 0], sizes = [16, 128], strides = [1, 1]} : vector<32x128xf32> to vector<16x128xf32>
    %c0_41 = arith.constant 0 : index
    %c1_42 = arith.constant 1 : index
    %c0_43 = arith.constant 0 : index
    %c0_44 = arith.constant 0 : index
    %78 = vector.load %arg8[%c0_41, %c1_42, %c0_43, %c0_44] : memref<1x2x16x128xf32, #tpu.memory_space<vmem>>, vector<1x1x16x128xf32>
    %79 = vector.shape_cast %78 : vector<1x1x16x128xf32> to vector<16x128xf32>
    %80 = vector.shape_cast %77 : vector<16x128xf32> to vector<1x1x16x128xf32>
    tpu.vector_store %arg8[%c0_41, %c1_42, %c0_43, %c0_44], %80 {strides = array<i32>} : memref<1x2x16x128xf32, #tpu.memory_space<vmem>>, vector<1x1x16x128xf32>,
    return
  }
  func.func @transform_0(%arg0: i32) -> (i32, i32, i32) {
    %c0_i32 = arith.constant 0 : i32
    %c0_i32_0 = arith.constant 0 : i32
    %c0_i32_1 = arith.constant 0 : i32
    return %arg0, %c0_i32, %c0_i32_0 : i32, i32, i32
  }
  func.func @transform_1(%arg0: i32) -> (i32, i32, i32) {
    %c0_i32 = arith.constant 0 : i32
    %c0_i32_0 = arith.constant 0 : i32
    %c0_i32_1 = arith.constant 0 : i32
    %c0_i32_2 = arith.constant 0 : i32
    return %c0_i32, %c0_i32_0, %c0_i32_1 : i32, i32, i32
  }
  func.func @transform_2(%arg0: i32) -> (i32, i32) {
    %c0_i32 = arith.constant 0 : i32
    %c0_i32_0 = arith.constant 0 : i32
    %c0_i32_1 = arith.constant 0 : i32
    return %c0_i32, %c0_i32_0 : i32, i32
  }
  func.func @transform_3(%arg0: i32) -> (i32, i32) {
    %c0_i32 = arith.constant 0 : i32
    %c0_i32_0 = arith.constant 0 : i32
    %c0_i32_1 = arith.constant 0 : i32
    return %c0_i32, %c0_i32_0 : i32, i32
  }
  func.func @transform_4(%arg0: i32) -> (i32, i32) {
    %c0_i32 = arith.constant 0 : i32
    %c0_i32_0 = arith.constant 0 : i32
    %c0_i32_1 = arith.constant 0 : i32
    return %c0_i32, %c0_i32_0 : i32, i32
  }
  func.func @transform_5(%arg0: i32) -> (i32, i32) {
    %c0_i32 = arith.constant 0 : i32
    %c0_i32_0 = arith.constant 0 : i32
    %c0_i32_1 = arith.constant 0 : i32
    return %c0_i32, %c0_i32_0 : i32, i32
  }
  func.func @transform_6(%arg0: i32) -> (i32, i32) {
    %c0_i32 = arith.constant 0 : i32
    %c0_i32_0 = arith.constant 0 : i32
    %c0_i32_1 = arith.constant 0 : i32
    return %c0_i32, %c0_i32_0 : i32, i32
  }
  func.func @transform_7(%arg0: i32) -> (i32, i32, i32, i32) {
    %c0_i32 = arith.constant 0 : i32
    %c0_i32_0 = arith.constant 0 : i32
    %c0_i32_1 = arith.constant 0 : i32
    %c0_i32_2 = arith.constant 0 : i32
    return %arg0, %c0_i32, %c0_i32_0, %c0_i32_1 : i32, i32, i32, i32
  }
}

</mosaic_0001>

<llo_original>
// kernel: tpu_custom_call.1
$region0: #{tpu_custom_call.1}
  #allocation0 [shape = 'u32[]', space=smem, size = 0x4, offset = 0x4, fixed_abs, tag = 'smem constant byte address 0x4 - core index']
  #allocation1 [shape = 'u32[144,128]{1,0:T(1,128)}', space=vmem, size = 0x12000, scoped, tag = 'internal scratch']
  %s0 = inlined_call_operand.vmem [shape: bf16[2,20,512], index: 0, kind: input, shape index: {}]
  %s1 = inlined_call_operand.hbm [shape: bf16[5,512,128], index: 1, kind: input, shape index: {}]
  %s2 = inlined_call_operand.vmem [shape: f32[1,128], index: 2, kind: input, shape index: {}]
  %s3 = inlined_call_operand.hbm [shape: bf16[640,128], index: 3, kind: input, shape index: {}]
  %s4 = inlined_call_operand.vmem [shape: f32[1,128], index: 4, kind: input, shape index: {}]
  %s5 = inlined_call_operand.vmem [shape: bf16[128,128], index: 5, kind: input, shape index: {}]
  %s6 = inlined_call_operand.vmem [shape: f32[1,128], index: 6, kind: input, shape index: {}]
  %s7 = inlined_call_operand.hbm [shape: f32[2,2,16,128], index: 7, kind: output, shape index: {}]
  %s8 = sld [smem:[#allocation0]]
  $region69: #{tpu_custom_call.1} parent=0
    _
  %s10 = ssub.s32 1, %s8
  %s11 = scalar_select 0, %s10, %s8
  $region1: #{tpu_custom_call.1} parent=0
    #allocation2 [shape = 'u8[655360]{0}', space=vmem, size = 0xa0000, scoped, tag = 'input window, operand 1, single buffered']
    #allocation3 [shape = 's32[2]{0}', space=sflag, size = 0x8, scoped, tag = 'scoped memory for tpu_custom_call.1']
    #allocation4 [shape = 's32[2]{0}', space=sflag, size = 0x8, scoped, tag = 'scoped memory for tpu_custom_call.1']
    #allocation5 [shape = 'u8[163840]{0}', space=vmem, size = 0x28000, scoped, tag = 'input window, operand 3, single buffered']
    #allocation6 [shape = 's32[1]{0}', space=sflag, size = 0x4, scoped, tag = 'scoped memory for tpu_custom_call.1']
    #allocation7 [shape = 'u8[32768]{0}', space=vmem, size = 0x8000, scoped, tag = 'output window, operand 0']
    %12 = vsyncpa [#allocation3], 0
    %13 = vsyncpa [#allocation6], 0
    %14 = vsyncpa [#allocation4], 0
    %s15 = scalar_lea.sflag [#allocation4], 1
    %16 = vsyncpa %s15, 0
    loop: start=0, step=1, limit=4
    $region2: #{tpu_custom_call.1} parent=1 // loop_pre_header
      _
    $region3: #{tpu_custom_call.1} parent=1 // loop_header
      %s18 = sphi 0, %s22
      %p19 = scmp.ge.s32.totalorder %s18, 4
      %s28 = sphi 0, %s30
      %s31 = sphi 0, %s28
      %s32 = sphi 0, %s31
      %s48 = sphi 0, %s32
      %s52 = sphi 0, %s52
      %s54 = sphi 0, %s52
      %s55 = sphi 0, %s54
      %s69 = sphi 0, %s55
      %s73 = sphi 0, %s73
      %s75 = sphi 0, %s73
      %s76 = sphi 0, %s75
      %s90 = sphi 0, %s76
      %s94 = sphi 0, %s94
      %s96 = sphi 0, %s94
      %s97 = sphi 0, %s96
      %s111 = sphi 0, %s97
      %s115 = sphi 0, %s115
      %s117 = sphi 0, %s115
      %s118 = sphi 0, %s117
      %s132 = sphi 0, %s118
      %s136 = sphi 0, %s136
      %s138 = sphi 0, %s136
      %s139 = sphi 0, %s138
      %s153 = sphi 0, %s139
      %s157 = sphi 0, %s157
      %s159 = sphi 0, %s157
      %s160 = sphi 0, %s159
      %s174 = sphi 0, %s160
      %s180 = sphi 0, %s182
      %s183 = sphi 0, %s180
      %s184 = sphi 0, %s183
      %s200 = sphi 0, %s184
    $region4: #{tpu_custom_call.1} parent=1 // loop_header_branch
      %21 = sbr.rel (%p19) target = $region8
    $region5: #{tpu_custom_call.1} parent=1 // loop_body
      %s23 = ssub.s32 %s18, 1
      %s24 = ssub.s32 %s18, 2
      %s25 = sadd.s32 %s18, 1
      %s26 = ssub.s32 %s18, %s25
      %p27 = scmp.eq.s32.totalorder %s26, 0
      %s29 = sadd.s32 %s28, 1
      %s30 = scalar_select %p27, %s28, %s29
      %p33 = pneg %p27
      %p34 = scmp.eq.s32.totalorder %s18, 1
      %p35 = por %p33, %p34
      %p36 = scmp.ne.s32.totalorder %s28, %s31
      %p37 = scmp.eq.s32.totalorder %s18, 0
      %p38 = por %p36, %p37
      %p39 = scmp.ne.s32.totalorder %s28, %s31
      %p40 = scmp.eq.s32.totalorder %s23, 1
      %p41 = por %p39, %p40
      %p42 = scmp.ne.s32.totalorder %s31, %s32
      %p43 = scmp.eq.s32.totalorder %s23, 0
      %p44 = por %p42, %p43
      %p45 = scmp.ne.s32.totalorder %s31, %s32
      %p46 = scmp.eq.s32.totalorder %s24, 1
      %p47 = por %p45, %p46
      %p49 = scmp.ne.s32.totalorder %s32, %s48
      %p50 = scmp.eq.s32.totalorder %s24, 0
      %p51 = por %p49, %p50
      %s53 = sadd.s32 %s52, 1
      %p56 = scmp.eq.s32.totalorder %s18, 1
      %p57 = scmp.ne.s32.totalorder %s52, %s54
      %p58 = scmp.eq.s32.totalorder %s18, 0
      %p59 = por %p57, %p58
      %p60 = scmp.ne.s32.totalorder %s52, %s54
      %p61 = scmp.eq.s32.totalorder %s23, 1
      %p62 = por %p60, %p61
      %p63 = scmp.ne.s32.totalorder %s54, %s55
      %p64 = scmp.eq.s32.totalorder %s23, 0
      %p65 = por %p63, %p64
      %p66 = scmp.ne.s32.totalorder %s54, %s55
      %p67 = scmp.eq.s32.totalorder %s24, 1
      %p68 = por %p66, %p67
      %p70 = scmp.ne.s32.totalorder %s55, %s69
      %p71 = scmp.eq.s32.totalorder %s24, 0
      %p72 = por %p70, %p71
      %s74 = sadd.s32 %s73, 1
      %p77 = scmp.eq.s32.totalorder %s18, 1
      %p78 = scmp.ne.s32.totalorder %s73, %s75
      %p79 = scmp.eq.s32.totalorder %s18, 0
      %p80 = por %p78, %p79
      %p81 = scmp.ne.s32.totalorder %s73, %s75
      %p82 = scmp.eq.s32.totalorder %s23, 1
      %p83 = por %p81, %p82
      %p84 = scmp.ne.s32.totalorder %s75, %s76
      %p85 = scmp.eq.s32.totalorder %s23, 0
      %p86 = por %p84, %p85
      %p87 = scmp.ne.s32.totalorder %s75, %s76
      %p88 = scmp.eq.s32.totalorder %s24, 1
      %p89 = por %p87, %p88
      %p91 = scmp.ne.s32.totalorder %s76, %s90
      %p92 = scmp.eq.s32.totalorder %s24, 0
      %p93 = por %p91, %p92
      %s95 = sadd.s32 %s94, 1
      %p98 = scmp.eq.s32.totalorder %s18, 1
      %p99 = scmp.ne.s32.totalorder %s94, %s96
      %p100 = scmp.eq.s32.totalorder %s18, 0
      %p101 = por %p99, %p100
      %p102 = scmp.ne.s32.totalorder %s94, %s96
      %p103 = scmp.eq.s32.totalorder %s23, 1
      %p104 = por %p102, %p103
      %p105 = scmp.ne.s32.totalorder %s96, %s97
      %p106 = scmp.eq.s32.totalorder %s23, 0
      %p107 = por %p105, %p106
      %p108 = scmp.ne.s32.totalorder %s96, %s97
      %p109 = scmp.eq.s32.totalorder %s24, 1
      %p110 = por %p108, %p109
      %p112 = scmp.ne.s32.totalorder %s97, %s111
      %p113 = scmp.eq.s32.totalorder %s24, 0
      %p114 = por %p112, %p113
      %s116 = sadd.s32 %s115, 1
      %p119 = scmp.eq.s32.totalorder %s18, 1
      %p120 = scmp.ne.s32.totalorder %s115, %s117
      %p121 = scmp.eq.s32.totalorder %s18, 0
      %p122 = por %p120, %p121
      %p123 = scmp.ne.s32.totalorder %s115, %s117
      %p124 = scmp.eq.s32.totalorder %s23, 1
      %p125 = por %p123, %p124
      %p126 = scmp.ne.s32.totalorder %s117, %s118
      %p127 = scmp.eq.s32.totalorder %s23, 0
      %p128 = por %p126, %p127
      %p129 = scmp.ne.s32.totalorder %s117, %s118
      %p130 = scmp.eq.s32.totalorder %s24, 1
      %p131 = por %p129, %p130
      %p133 = scmp.ne.s32.totalorder %s118, %s132
      %p134 = scmp.eq.s32.totalorder %s24, 0
      %p135 = por %p133, %p134
      %s137 = sadd.s32 %s136, 1
      %p140 = scmp.eq.s32.totalorder %s18, 1
      %p141 = scmp.ne.s32.totalorder %s136, %s138
      %p142 = scmp.eq.s32.totalorder %s18, 0
      %p143 = por %p141, %p142
      %p144 = scmp.ne.s32.totalorder %s136, %s138
      %p145 = scmp.eq.s32.totalorder %s23, 1
      %p146 = por %p144, %p145
      %p147 = scmp.ne.s32.totalorder %s138, %s139
      %p148 = scmp.eq.s32.totalorder %s23, 0
      %p149 = por %p147, %p148
      %p150 = scmp.ne.s32.totalorder %s138, %s139
      %p151 = scmp.eq.s32.totalorder %s24, 1
      %p152 = por %p150, %p151
      %p154 = scmp.ne.s32.totalorder %s139, %s153
      %p155 = scmp.eq.s32.totalorder %s24, 0
      %p156 = por %p154, %p155
      %s158 = sadd.s32 %s157, 1
      %p161 = scmp.eq.s32.totalorder %s18, 1
      %p162 = scmp.ne.s32.totalorder %s157, %s159
      %p163 = scmp.eq.s32.totalorder %s18, 0
      %p164 = por %p162, %p163
      %p165 = scmp.ne.s32.totalorder %s157, %s159
      %p166 = scmp.eq.s32.totalorder %s23, 1
      %p167 = por %p165, %p166
      %p168 = scmp.ne.s32.totalorder %s159, %s160
      %p169 = scmp.eq.s32.totalorder %s23, 0
      %p170 = por %p168, %p169
      %p171 = scmp.ne.s32.totalorder %s159, %s160
      %p172 = scmp.eq.s32.totalorder %s24, 1
      %p173 = por %p171, %p172
      %p175 = scmp.ne.s32.totalorder %s160, %s174
      %p176 = scmp.eq.s32.totalorder %s24, 0
      %p177 = por %p175, %p176
      %s178 = ssub.s32 %s18, %s25
      %p179 = scmp.eq.s32.totalorder %s178, 0
      %s181 = sadd.s32 %s180, 1
      %s182 = scalar_select %p179, %s180, %s181
      %p185 = pneg %p179
      %p186 = scmp.eq.s32.totalorder %s18, 1
      %p187 = por %p185, %p186
      %p188 = scmp.ne.s32.totalorder %s180, %s183
      %p189 = scmp.eq.s32.totalorder %s18, 0
      %p190 = por %p188, %p189
      %p191 = scmp.ne.s32.totalorder %s180, %s183
      %p192 = scmp.eq.s32.totalorder %s23, 1
      %p193 = por %p191, %p192
      %p194 = scmp.ne.s32.totalorder %s183, %s184
      %p195 = scmp.eq.s32.totalorder %s23, 0
      %p196 = por %p194, %p195
      %p197 = scmp.ne.s32.totalorder %s183, %s184
      %p198 = scmp.eq.s32.totalorder %s24, 1
      %p199 = por %p197, %p198
      %p201 = scmp.ne.s32.totalorder %s184, %s200
      %p202 = scmp.eq.s32.totalorder %s24, 0
      %p203 = por %p201, %p202
      %p204 = scmp.le.s32.totalorder 1, %s18
      %p205 = scmp.lt.s32.totalorder %s18, 3
      %p206 = pnand %p204, %p205
      %p207 = pneg %p206
      // Predicated region
      $region9: #{tpu_custom_call.1} parent=5 // pred_check
        _
      $region10: #{tpu_custom_call.1} parent=5 // pred_check_branch
        %209 = sbr.rel (%p206) target = $region12
      $region11: #{tpu_custom_call.1} parent=5 // pred_region
        %s210 = ssub.s32 %s18, 1
        // Predicated region
        $region13: #{tpu_custom_call.1} parent=11 // pred_check
          %p211 = pneg %p65
        $region14: #{tpu_custom_call.1} parent=11 // pred_check_branch
          %213 = sbr.rel (%p211) target = $region16
        $region15: #{tpu_custom_call.1} parent=11 // pred_region
          %s215 = ssub.s32 20480, 20480
          %216 = vsyncadd [#allocation3], %s215
          %s217 = sshll.u32 [#allocation2], 4
          %s218 = int_to_ptr.vmem [resolvable:$true] %s217
          %223 = dma.hbm_to_vmem [thread:$0]  %s1, 20480, %s218, [#allocation3], 64, 64, 4
        $region16: #{tpu_custom_call.1} parent=11 // pred_fallthru
          _
        // Predicated region
        $region17: #{tpu_custom_call.1} parent=11 // pred_check
          %p224 = pneg %p86
        $region18: #{tpu_custom_call.1} parent=11 // pred_check_branch
          %226 = sbr.rel (%p224) target = $region20
        $region19: #{tpu_custom_call.1} parent=11 // pred_region
          _
        $region20: #{tpu_custom_call.1} parent=11 // pred_fallthru
          _
        // Predicated region
        $region21: #{tpu_custom_call.1} parent=11 // pred_check
          %p227 = pneg %p107
        $region22: #{tpu_custom_call.1} parent=11 // pred_check_branch
          %229 = sbr.rel (%p227) target = $region24
        $region23: #{tpu_custom_call.1} parent=11 // pred_region
          %s231 = ssub.s32 5120, 5120
          %232 = vsyncadd [#allocation6], %s231
          %s233 = sshll.u32 [#allocation5], 4
          %s234 = int_to_ptr.vmem [resolvable:$true] %s233
          %239 = dma.hbm_to_vmem [thread:$0]  %s3, 5120, %s234, [#allocation6], 64, 64, 4
        $region24: #{tpu_custom_call.1} parent=11 // pred_fallthru
          _
        // Predicated region
        $region25: #{tpu_custom_call.1} parent=11 // pred_check
          %p240 = pneg %p128
        $region26: #{tpu_custom_call.1} parent=11 // pred_check_branch
          %242 = sbr.rel (%p240) target = $region28
        $region27: #{tpu_custom_call.1} parent=11 // pred_region
          _
        $region28: #{tpu_custom_call.1} parent=11 // pred_fallthru
          _
        // Predicated region
        $region29: #{tpu_custom_call.1} parent=11 // pred_check
          %p243 = pneg %p149
        $region30: #{tpu_custom_call.1} parent=11 // pred_check_branch
          %245 = sbr.rel (%p243) target = $region32
        $region31: #{tpu_custom_call.1} parent=11 // pred_region
          _
        $region32: #{tpu_custom_call.1} parent=11 // pred_fallthru
          _
        // Predicated region
        $region33: #{tpu_custom_call.1} parent=11 // pred_check
          %p246 = pneg %p170
        $region34: #{tpu_custom_call.1} parent=11 // pred_check_branch
          %248 = sbr.rel (%p246) target = $region36
        $region35: #{tpu_custom_call.1} parent=11 // pred_region
          _
        $region36: #{tpu_custom_call.1} parent=11 // pred_fallthru
          _
      $region12: #{tpu_custom_call.1} parent=5 // pred_fallthru
        _
      %p249 = scmp.lt.s32.totalorder %s18, 2
      // Predicated region
      $region37: #{tpu_custom_call.1} parent=5 // pred_check
        %p250 = pneg %p249
      $region38: #{tpu_custom_call.1} parent=5 // pred_check_branch
        %252 = sbr.rel (%p250) target = $region40
      $region39: #{tpu_custom_call.1} parent=5 // pred_region
        // Predicated region
        $region41: #{tpu_custom_call.1} parent=39 // pred_check
          %p253 = pneg %p38
        $region42: #{tpu_custom_call.1} parent=39 // pred_check_branch
          %255 = sbr.rel (%p253) target = $region44
        $region43: #{tpu_custom_call.1} parent=39 // pred_region
          %p256 = scmp.lt.s32.totalorder %s18, 1
          %s257 = scalar_select %p256, %s18, 1
          %s258 = smul.addr %s257, 12
          %s259 = smul.addr %s258, 4
          %s260 = scalar_lea.vmem %s0, %s259
        $region44: #{tpu_custom_call.1} parent=39 // pred_fallthru
          _
      $region40: #{tpu_custom_call.1} parent=5 // pred_fallthru
        _
      %p261 = scmp.le.s32.totalorder 1, %s18
      %p262 = scmp.lt.s32.totalorder %s18, 3
      %p263 = pnand %p261, %p262
      %p264 = pneg %p263
      // Predicated region
      $region45: #{tpu_custom_call.1} parent=5 // pred_check
        _
      $region46: #{tpu_custom_call.1} parent=5 // pred_check_branch
        %266 = sbr.rel (%p263) target = $region48
      $region47: #{tpu_custom_call.1} parent=5 // pred_region
        %s267 = ssub.s32 %s18, 1
        // Predicated region
        $region49: #{tpu_custom_call.1} parent=47 // pred_check
          %p268 = pneg %p65
        $region50: #{tpu_custom_call.1} parent=47 // pred_check_branch
          %270 = sbr.rel (%p268) target = $region52
        $region51: #{tpu_custom_call.1} parent=47 // pred_region
          %271 = dma.done [#allocation3], 20480
        $region52: #{tpu_custom_call.1} parent=47 // pred_fallthru
          _
        // Predicated region
        $region53: #{tpu_custom_call.1} parent=47 // pred_check
          %p272 = pneg %p107
        $region54: #{tpu_custom_call.1} parent=47 // pred_check_branch
          %274 = sbr.rel (%p272) target = $region56
        $region55: #{tpu_custom_call.1} parent=47 // pred_region
          %275 = dma.done [#allocation6], 5120
        $region56: #{tpu_custom_call.1} parent=47 // pred_fallthru
          _
        %p276 = scmp.lt.s32.totalorder %s23, 1
        %s277 = scalar_select %p276, %s23, 1
        %s278 = smul.addr %s277, 12
        %s279 = smul.addr %s278, 4
        %s280 = scalar_lea.vmem %s0, %s279
        %p281 = pneg %p44
        %p282 = pneg %p41
        %p283 = pneg %p65
        %p284 = pneg %p62
        %p285 = pneg %p86
        %p286 = pneg %p83
        %p287 = pneg %p107
        %p288 = pneg %p104
        %p289 = pneg %p128
        %p290 = pneg %p125
        %p291 = pneg %p149
        %p292 = pneg %p146
        %p293 = pneg %p170
        %p294 = pneg %p167
        %p295 = pneg %p196
        %p296 = pneg %p193
        %s297 = sand.u32 %s183, 1
        %s298 = scalar_lea.sflag [#allocation4], %s297
        %s299 = sand.u32 %s183, 1
        %s300 = smul.addr %s299, 32
        %s301 = scalar_lea.vmem [#allocation7], %s300
        %p302 = scmp.lt.s32.totalorder %s23, 1
        %s303 = scalar_select %p302, %s23, 1
        %s304 = smul.addr %s303, 12
        %s305 = smul.addr %s304, 4
        %s306 = scalar_lea.vmem %s0, %s305
        %v308 = vld [vmem:[%s306] sm:$0xff]
        %v309 = vld [vmem:[%s306 + $0x8] sm:$0xff]
        %v310 = vld [vmem:[%s306 + $0x10] sm:$0xff]
        %v311 = vld [vmem:[%s306 + $0x18] sm:$0xff]
        %v312 = vld [vmem:[%s306 + $0x20] sm:$0x33]
        %v313 = vld [vmem:[%s306 + $0x28] sm:$0x33]
        %v314 = vld [vmem:[#allocation2] sm:$0xf]
        %v315 = vld [vmem:[#allocation2 + $0x4] sm:$0xf]
        %v316 = vld [vmem:[#allocation2 + $0x8] sm:$0xf]
        %v317 = vld [vmem:[#allocation2 + $0xc] sm:$0xf]
        %v318 = vld [vmem:[#allocation2 + $0x10] sm:$0xf]
        %v319 = vld [vmem:[#allocation2 + $0x14] sm:$0xf]
        %v320 = vld [vmem:[#allocation2 + $0x18] sm:$0xf]
        %v321 = vld [vmem:[#allocation2 + $0x1c] sm:$0xf]
        %v322 = vld [vmem:[#allocation2 + $0x20] sm:$0xf]
        %v323 = vld [vmem:[#allocation2 + $0x24] sm:$0xf]
        %v324 = vld [vmem:[#allocation2 + $0x28] sm:$0xf]
        %v325 = vld [vmem:[#allocation2 + $0x2c] sm:$0xf]
        %v326 = vld [vmem:[#allocation2 + $0x30] sm:$0xf]
        %v327 = vld [vmem:[#allocation2 + $0x34] sm:$0xf]
        %v328 = vld [vmem:[#allocation2 + $0x38] sm:$0xf]
        %v329 = vld [vmem:[#allocation2 + $0x3c] sm:$0xf]
        %v330 = vld [vmem:[#allocation2 + $0x40] sm:$0xf]
        %v331 = vld [vmem:[#allocation2 + $0x44] sm:$0xf]
        %v332 = vld [vmem:[#allocation2 + $0x48] sm:$0xf]
        %v333 = vld [vmem:[#allocation2 + $0x4c] sm:$0xf]
        %v334 = vld [vmem:[#allocation2 + $0x50] sm:$0xf]
        %v335 = vld [vmem:[#allocation2 + $0x54] sm:$0xf]
        %v336 = vld [vmem:[#allocation2 + $0x58] sm:$0xf]
        %v337 = vld [vmem:[#allocation2 + $0x5c] sm:$0xf]
        %v338 = vld [vmem:[#allocation2 + $0x60] sm:$0xf]
        %v339 = vld [vmem:[#allocation2 + $0x64] sm:$0xf]
        %v340 = vld [vmem:[#allocation2 + $0x68] sm:$0xf]
        %v341 = vld [vmem:[#allocation2 + $0x6c] sm:$0xf]
        %v342 = vld [vmem:[#allocation2 + $0x70] sm:$0xf]
        %v343 = vld [vmem:[#allocation2 + $0x74] sm:$0xf]
        %v344 = vld [vmem:[#allocation2 + $0x78] sm:$0xf]
        %v345 = vld [vmem:[#allocation2 + $0x7c] sm:$0xf]
        %v346 = vld [vmem:[#allocation2 + $0x80] sm:$0xf]
        %v347 = vld [vmem:[#allocation2 + $0x84] sm:$0xf]
        %v348 = vld [vmem:[#allocation2 + $0x88] sm:$0xf]
        %v349 = vld [vmem:[#allocation2 + $0x8c] sm:$0xf]
        %v350 = vld [vmem:[#allocation2 + $0x90] sm:$0xf]
        %v351 = vld [vmem:[#allocation2 + $0x94] sm:$0xf]
        %v352 = vld [vmem:[#allocation2 + $0x98] sm:$0xf]
        %v353 = vld [vmem:[#allocation2 + $0x9c] sm:$0xf]
        %v354 = vld [vmem:[#allocation2 + $0xa0] sm:$0xf]
        %v355 = vld [vmem:[#allocation2 + $0xa4] sm:$0xf]
        %v356 = vld [vmem:[#allocation2 + $0xa8] sm:$0xf]
        %v357 = vld [vmem:[#allocation2 + $0xac] sm:$0xf]
        %v358 = vld [vmem:[#allocation2 + $0xb0] sm:$0xf]
        %v359 = vld [vmem:[#allocation2 + $0xb4] sm:$0xf]
        %v360 = vld [vmem:[#allocation2 + $0xb8] sm:$0xf]
        %v361 = vld [vmem:[#allocation2 + $0xbc] sm:$0xf]
        %v362 = vld [vmem:[#allocation2 + $0xc0] sm:$0xf]
        %v363 = vld [vmem:[#allocation2 + $0xc4] sm:$0xf]
        %v364 = vld [vmem:[#allocation2 + $0xc8] sm:$0xf]
        %v365 = vld [vmem:[#allocation2 + $0xcc] sm:$0xf]
        %v366 = vld [vmem:[#allocation2 + $0xd0] sm:$0xf]
        %v367 = vld [vmem:[#allocation2 + $0xd4] sm:$0xf]
        %v368 = vld [vmem:[#allocation2 + $0xd8] sm:$0xf]
        %v369 = vld [vmem:[#allocation2 + $0xdc] sm:$0xf]
        %v370 = vld [vmem:[#allocation2 + $0xe0] sm:$0xf]
        %v371 = vld [vmem:[#allocation2 + $0xe4] sm:$0xf]
        %v372 = vld [vmem:[#allocation2 + $0xe8] sm:$0xf]
        %v373 = vld [vmem:[#allocation2 + $0xec] sm:$0xf]
        %v374 = vld [vmem:[#allocation2 + $0xf0] sm:$0xf]
        %v375 = vld [vmem:[#allocation2 + $0xf4] sm:$0xf]
        %v376 = vld [vmem:[#allocation2 + $0xf8] sm:$0xf]
        %v377 = vld [vmem:[#allocation2 + $0xfc] sm:$0xf]
        %s378 = scalar_lea.vmem [#allocation2], 256
        %v379 = vld [vmem:[%s378] sm:$0xf]
        %v380 = vld [vmem:[%s378 + $0x4] sm:$0xf]
        %v381 = vld [vmem:[%s378 + $0x8] sm:$0xf]
        %v382 = vld [vmem:[%s378 + $0xc] sm:$0xf]
        %v383 = vld [vmem:[%s378 + $0x10] sm:$0xf]
        %v384 = vld [vmem:[%s378 + $0x14] sm:$0xf]
        %v385 = vld [vmem:[%s378 + $0x18] sm:$0xf]
        %v386 = vld [vmem:[%s378 + $0x1c] sm:$0xf]
        %v387 = vld [vmem:[%s378 + $0x20] sm:$0xf]
        %v388 = vld [vmem:[%s378 + $0x24] sm:$0xf]
        %v389 = vld [vmem:[%s378 + $0x28] sm:$0xf]
        %v390 = vld [vmem:[%s378 + $0x2c] sm:$0xf]
        %v391 = vld [vmem:[%s378 + $0x30] sm:$0xf]
        %v392 = vld [vmem:[%s378 + $0x34] sm:$0xf]
        %v393 = vld [vmem:[%s378 + $0x38] sm:$0xf]
        %v394 = vld [vmem:[%s378 + $0x3c] sm:$0xf]
        %v395 = vld [vmem:[%s378 + $0x40] sm:$0xf]
        %v396 = vld [vmem:[%s378 + $0x44] sm:$0xf]
        %v397 = vld [vmem:[%s378 + $0x48] sm:$0xf]
        %v398 = vld [vmem:[%s378 + $0x4c] sm:$0xf]
        %v399 = vld [vmem:[%s378 + $0x50] sm:$0xf]
        %v400 = vld [vmem:[%s378 + $0x54] sm:$0xf]
        %v401 = vld [vmem:[%s378 + $0x58] sm:$0xf]
        %v402 = vld [vmem:[%s378 + $0x5c] sm:$0xf]
        %v403 = vld [vmem:[%s378 + $0x60] sm:$0xf]
        %v404 = vld [vmem:[%s378 + $0x64] sm:$0xf]
        %v405 = vld [vmem:[%s378 + $0x68] sm:$0xf]
        %v406 = vld [vmem:[%s378 + $0x6c] sm:$0xf]
        %v407 = vld [vmem:[%s378 + $0x70] sm:$0xf]
        %v408 = vld [vmem:[%s378 + $0x74] sm:$0xf]
        %v409 = vld [vmem:[%s378 + $0x78] sm:$0xf]
        %v410 = vld [vmem:[%s378 + $0x7c] sm:$0xf]
        %v411 = vld [vmem:[%s378 + $0x80] sm:$0xf]
        %v412 = vld [vmem:[%s378 + $0x84] sm:$0xf]
        %v413 = vld [vmem:[%s378 + $0x88] sm:$0xf]
        %v414 = vld [vmem:[%s378 + $0x8c] sm:$0xf]
        %v415 = vld [vmem:[%s378 + $0x90] sm:$0xf]
        %v416 = vld [vmem:[%s378 + $0x94] sm:$0xf]
        %v417 = vld [vmem:[%s378 + $0x98] sm:$0xf]
        %v418 = vld [vmem:[%s378 + $0x9c] sm:$0xf]
        %v419 = vld [vmem:[%s378 + $0xa0] sm:$0xf]
        %v420 = vld [vmem:[%s378 + $0xa4] sm:$0xf]
        %v421 = vld [vmem:[%s378 + $0xa8] sm:$0xf]
        %v422 = vld [vmem:[%s378 + $0xac] sm:$0xf]
        %v423 = vld [vmem:[%s378 + $0xb0] sm:$0xf]
        %v424 = vld [vmem:[%s378 + $0xb4] sm:$0xf]
        %v425 = vld [vmem:[%s378 + $0xb8] sm:$0xf]
        %v426 = vld [vmem:[%s378 + $0xbc] sm:$0xf]
        %v427 = vld [vmem:[%s378 + $0xc0] sm:$0xf]
        %v428 = vld [vmem:[%s378 + $0xc4] sm:$0xf]
        %v429 = vld [vmem:[%s378 + $0xc8] sm:$0xf]
        %v430 = vld [vmem:[%s378 + $0xcc] sm:$0xf]
        %v431 = vld [vmem:[%s378 + $0xd0] sm:$0xf]
        %v432 = vld [vmem:[%s378 + $0xd4] sm:$0xf]
        %v433 = vld [vmem:[%s378 + $0xd8] sm:$0xf]
        %v434 = vld [vmem:[%s378 + $0xdc] sm:$0xf]
        %v435 = vld [vmem:[%s378 + $0xe0] sm:$0xf]
        %v436 = vld [vmem:[%s378 + $0xe4] sm:$0xf]
        %v437 = vld [vmem:[%s378 + $0xe8] sm:$0xf]
        %v438 = vld [vmem:[%s378 + $0xec] sm:$0xf]
        %v439 = vld [vmem:[%s378 + $0xf0] sm:$0xf]
        %v440 = vld [vmem:[%s378 + $0xf4] sm:$0xf]
        %v441 = vld [vmem:[%s378 + $0xf8] sm:$0xf]
        %v442 = vld [vmem:[%s378 + $0xfc] sm:$0xf]
        %v449 = vunpack.c.l.b16 %v308
        %v450 = vunpack.c.h.b16 %v308
        %v451 = vunpack.c.l.b16 %v309
        %v452 = vunpack.c.h.b16 %v309
        %v453 = vunpack.c.l.b16 %v310
        %v454 = vunpack.c.h.b16 %v310
        %v455 = vunpack.c.l.b16 %v311
        %v456 = vunpack.c.h.b16 %v311
        %v457 = vunpack.c.l.b16 %v312
        %v458 = vunpack.c.h.b16 %v312
        %v459 = vunpack.c.l.b16 %v313
        %v460 = vunpack.c.h.b16 %v313
        %v461 = vpack.c.b16 %v453, %v449
        %v462 = vpack.c.b16 %v454, %v450
        %v463 = vpack.c.b16 %v455, %v451
        %v464 = vpack.c.b16 %v456, %v452
        %v465 = vpack.c.b16 %v457, %v457
        %v466 = vpack.c.b16 %v458, %v458
        %v467 = vpack.c.b16 %v459, %v459
        %v468 = vpack.c.b16 %v460, %v460
        %vm469 = vsmask.f32 7424
        %v471 = vshrl.u32 %v461, 16
        %v473 = vshll.u32 %v461, 16
        %v475 = vrot.slane %v473, 1
        %v476 = vor.u32 %v471, %v475
        %v478 = vshll.u32 %v465, 16
        %v480 = vrot.slane %v478, 1
        %v481 = vsel %vm469, %v476, %v480
        %v483 = vshrl.u32 %v462, 16
        %v485 = vshll.u32 %v462, 16
        %v487 = vrot.slane %v485, 1
        %v488 = vor.u32 %v483, %v487
        %v490 = vshll.u32 %v466, 16
        %v492 = vrot.slane %v490, 1
        %v493 = vsel %vm469, %v488, %v492
        %v495 = vshrl.u32 %v463, 16
        %v497 = vshll.u32 %v463, 16
        %v499 = vrot.slane %v497, 1
        %v500 = vor.u32 %v495, %v499
        %v502 = vshll.u32 %v467, 16
        %v504 = vrot.slane %v502, 1
        %v505 = vsel %vm469, %v500, %v504
        %v507 = vshrl.u32 %v464, 16
        %v509 = vshll.u32 %v464, 16
        %v511 = vrot.slane %v509, 1
        %v512 = vor.u32 %v507, %v511
        %v514 = vshll.u32 %v468, 16
        %v516 = vrot.slane %v514, 1
        %v517 = vsel %vm469, %v512, %v516
        %v586 = vunpack.c.l.b16 %v379
        %v587 = vunpack.c.l.b16 %v380
        %v588 = vunpack.c.l.b16 %v381
        %v589 = vunpack.c.l.b16 %v382
        %v590 = vunpack.c.l.b16 %v383
        %v591 = vunpack.c.l.b16 %v384
        %v592 = vunpack.c.l.b16 %v385
        %v593 = vunpack.c.l.b16 %v386
        %v594 = vunpack.c.l.b16 %v387
        %v595 = vunpack.c.l.b16 %v388
        %v596 = vunpack.c.l.b16 %v389
        %v597 = vunpack.c.l.b16 %v390
        %v598 = vunpack.c.l.b16 %v391
        %v599 = vunpack.c.l.b16 %v392
        %v600 = vunpack.c.l.b16 %v393
        %v601 = vunpack.c.l.b16 %v394
        %v602 = vunpack.c.l.b16 %v395
        %v603 = vunpack.c.l.b16 %v396
        %v604 = vunpack.c.l.b16 %v397
        %v605 = vunpack.c.l.b16 %v398
        %v606 = vunpack.c.l.b16 %v399
        %v607 = vunpack.c.l.b16 %v400
        %v608 = vunpack.c.l.b16 %v401
        %v609 = vunpack.c.l.b16 %v402
        %v610 = vunpack.c.l.b16 %v403
        %v611 = vunpack.c.l.b16 %v404
        %v612 = vunpack.c.l.b16 %v405
        %v613 = vunpack.c.l.b16 %v406
        %v614 = vunpack.c.l.b16 %v407
        %v615 = vunpack.c.l.b16 %v408
        %v616 = vunpack.c.l.b16 %v409
        %v617 = vunpack.c.l.b16 %v410
        %v618 = vunpack.c.l.b16 %v411
        %v619 = vunpack.c.l.b16 %v412
        %v620 = vunpack.c.l.b16 %v413
        %v621 = vunpack.c.l.b16 %v414
        %v622 = vunpack.c.l.b16 %v415
        %v623 = vunpack.c.l.b16 %v416
        %v624 = vunpack.c.l.b16 %v417
        %v625 = vunpack.c.l.b16 %v418
        %v626 = vunpack.c.l.b16 %v419
        %v627 = vunpack.c.l.b16 %v420
        %v628 = vunpack.c.l.b16 %v421
        %v629 = vunpack.c.l.b16 %v422
        %v630 = vunpack.c.l.b16 %v423
        %v631 = vunpack.c.l.b16 %v424
        %v632 = vunpack.c.l.b16 %v425
        %v633 = vunpack.c.l.b16 %v426
        %v634 = vunpack.c.l.b16 %v427
        %v635 = vunpack.c.l.b16 %v428
        %v636 = vunpack.c.l.b16 %v429
        %v637 = vunpack.c.l.b16 %v430
        %v638 = vunpack.c.l.b16 %v431
        %v639 = vunpack.c.l.b16 %v432
        %v640 = vunpack.c.l.b16 %v433
        %v641 = vunpack.c.l.b16 %v434
        %v642 = vunpack.c.l.b16 %v435
        %v643 = vunpack.c.l.b16 %v436
        %v644 = vunpack.c.l.b16 %v437
        %v645 = vunpack.c.l.b16 %v438
        %v646 = vunpack.c.l.b16 %v439
        %v647 = vunpack.c.l.b16 %v440
        %v648 = vunpack.c.l.b16 %v441
        %v649 = vunpack.c.l.b16 %v442
        %v650 = vpack.c.b16 %v587, %v586
        %v651 = vpack.c.b16 %v589, %v588
        %v652 = vpack.c.b16 %v591, %v590
        %v653 = vpack.c.b16 %v593, %v592
        %v654 = vpack.c.b16 %v595, %v594
        %v655 = vpack.c.b16 %v597, %v596
        %v656 = vpack.c.b16 %v599, %v598
        %v657 = vpack.c.b16 %v601, %v600
        %v658 = vpack.c.b16 %v603, %v602
        %v659 = vpack.c.b16 %v605, %v604
        %v660 = vpack.c.b16 %v607, %v606
        %v661 = vpack.c.b16 %v609, %v608
        %v662 = vpack.c.b16 %v611, %v610
        %v663 = vpack.c.b16 %v613, %v612
        %v664 = vpack.c.b16 %v615, %v614
        %v665 = vpack.c.b16 %v617, %v616
        %v666 = vpack.c.b16 %v619, %v618
        %v667 = vpack.c.b16 %v621, %v620
        %v668 = vpack.c.b16 %v623, %v622
        %v669 = vpack.c.b16 %v625, %v624
        %v670 = vpack.c.b16 %v627, %v626
        %v671 = vpack.c.b16 %v629, %v628
        %v672 = vpack.c.b16 %v631, %v630
        %v673 = vpack.c.b16 %v633, %v632
        %v674 = vpack.c.b16 %v635, %v634
        %v675 = vpack.c.b16 %v637, %v636
        %v676 = vpack.c.b16 %v639, %v638
        %v677 = vpack.c.b16 %v641, %v640
        %v678 = vpack.c.b16 %v643, %v642
        %v679 = vpack.c.b16 %v645, %v644
        %v680 = vpack.c.b16 %v647, %v646
        %v681 = vpack.c.b16 %v649, %v648
        %714 = vmatprep.subr.bf16.mxu0 0
        %715 = vmatpush1.bf16.msra.mxu0 %v650
        %716 = vmatprep.subr.bf16.mxu0 0
        %717 = vmatpush1.bf16.msra.mxu0 %v651
        %718 = vmatprep.subr.bf16.mxu0 0
        %719 = vmatpush1.bf16.msra.mxu0 %v652
        %720 = vmatprep.subr.bf16.mxu0 0
        %721 = vmatpush1.bf16.msra.mxu0 %v653
        %722 = vmatprep.subr.bf16.mxu0 0
        %723 = vmatpush1.bf16.msra.mxu0 %v654
        %724 = vmatprep.subr.bf16.mxu0 0
        %725 = vmatpush1.bf16.msra.mxu0 %v655
        %726 = vmatprep.subr.bf16.mxu0 0
        %727 = vmatpush1.bf16.msra.mxu0 %v656
        %728 = vmatprep.subr.bf16.mxu0 0
        %729 = vmatpush1.bf16.msra.mxu0 %v657
        %730 = vmatprep.subr.bf16.mxu0 0
        %731 = vmatpush1.bf16.msra.mxu0 %v658
        %732 = vmatprep.subr.bf16.mxu0 0
        %733 = vmatpush1.bf16.msra.mxu0 %v659
        %734 = vmatprep.subr.bf16.mxu0 0
        %735 = vmatpush1.bf16.msra.mxu0 %v660
        %736 = vmatprep.subr.bf16.mxu0 0
        %737 = vmatpush1.bf16.msra.mxu0 %v661
        %738 = vmatprep.subr.bf16.mxu0 0
        %739 = vmatpush1.bf16.msra.mxu0 %v662
        %740 = vmatprep.subr.bf16.mxu0 0
        %741 = vmatpush1.bf16.msra.mxu0 %v663
        %742 = vmatprep.subr.bf16.mxu0 0
        %743 = vmatpush1.bf16.msra.mxu0 %v664
        %744 = vmatprep.subr.bf16.mxu0 0
        %745 = vmatpush1.bf16.msra.mxu0 %v665
        %746 = vmatprep.mubr.bf16.mxu0 %v493
        %747 = vmatmul.mubr.bf16.gmra.mrb[0].mxu0 %v481
        %v748 = vpop.f32.mrb[0].mxu0
        %v749 = vadd.f32 0.0, %v748
        %v750 = vpop.f32.mrb[0].mxu0
        %v751 = vpop.f32.mrb[0].mxu0
        %v752 = vadd.f32 0.0, %v751
        %v753 = vpop.f32.mrb[0].mxu0
        %754 = vdwg.mxu0
        %755 = vmatprep.subr.bf16.mxu0 0
        %756 = vmatpush1.bf16.msra.mxu0 %v666
        %757 = vmatprep.subr.bf16.mxu0 0
        %758 = vmatpush1.bf16.msra.mxu0 %v667
        %759 = vmatprep.subr.bf16.mxu0 0
        %760 = vmatpush1.bf16.msra.mxu0 %v668
        %761 = vmatprep.subr.bf16.mxu0 0
        %762 = vmatpush1.bf16.msra.mxu0 %v669
        %763 = vmatprep.subr.bf16.mxu0 0
        %764 = vmatpush1.bf16.msra.mxu0 %v670
        %765 = vmatprep.subr.bf16.mxu0 0
        %766 = vmatpush1.bf16.msra.mxu0 %v671
        %767 = vmatprep.subr.bf16.mxu0 0
        %768 = vmatpush1.bf16.msra.mxu0 %v672
        %769 = vmatprep.subr.bf16.mxu0 0
        %770 = vmatpush1.bf16.msra.mxu0 %v673
        %771 = vmatprep.subr.bf16.mxu0 0
        %772 = vmatpush1.bf16.msra.mxu0 %v674
        %773 = vmatprep.subr.bf16.mxu0 0
        %774 = vmatpush1.bf16.msra.mxu0 %v675
        %775 = vmatprep.subr.bf16.mxu0 0
        %776 = vmatpush1.bf16.msra.mxu0 %v676
        %777 = vmatprep.subr.bf16.mxu0 0
        %778 = vmatpush1.bf16.msra.mxu0 %v677
        %779 = vmatprep.subr.bf16.mxu0 0
        %780 = vmatpush1.bf16.msra.mxu0 %v678
        %781 = vmatprep.subr.bf16.mxu0 0
        %782 = vmatpush1.bf16.msra.mxu0 %v679
        %783 = vmatprep.subr.bf16.mxu0 0
        %784 = vmatpush1.bf16.msra.mxu0 %v680
        %785 = vmatprep.subr.bf16.mxu0 0
        %786 = vmatpush1.bf16.msra.mxu0 %v681
        %787 = vmatprep.mubr.bf16.mxu0 %v517
        %788 = vmatmul.mubr.bf16.gmra.mrb[0].mxu0 %v505
        %v789 = vpop.f32.mrb[0].mxu0
        %v790 = vadd.f32 %v749, %v789
        %v791 = vpop.f32.mrb[0].mxu0
        %v792 = vpop.f32.mrb[0].mxu0
        %v793 = vadd.f32 %v752, %v792
        %v794 = vpop.f32.mrb[0].mxu0
        %795 = vdwg.mxu0
        %v864 = vunpack.c.l.b16 %v314
        %v865 = vunpack.c.l.b16 %v315
        %v866 = vunpack.c.l.b16 %v316
        %v867 = vunpack.c.l.b16 %v317
        %v868 = vunpack.c.l.b16 %v318
        %v869 = vunpack.c.l.b16 %v319
        %v870 = vunpack.c.l.b16 %v320
        %v871 = vunpack.c.l.b16 %v321
        %v872 = vunpack.c.l.b16 %v322
        %v873 = vunpack.c.l.b16 %v323
        %v874 = vunpack.c.l.b16 %v324
        %v875 = vunpack.c.l.b16 %v325
        %v876 = vunpack.c.l.b16 %v326
        %v877 = vunpack.c.l.b16 %v327
        %v878 = vunpack.c.l.b16 %v328
        %v879 = vunpack.c.l.b16 %v329
        %v880 = vunpack.c.l.b16 %v330
        %v881 = vunpack.c.l.b16 %v331
        %v882 = vunpack.c.l.b16 %v332
        %v883 = vunpack.c.l.b16 %v333
        %v884 = vunpack.c.l.b16 %v334
        %v885 = vunpack.c.l.b16 %v335
        %v886 = vunpack.c.l.b16 %v336
        %v887 = vunpack.c.l.b16 %v337
        %v888 = vunpack.c.l.b16 %v338
        %v889 = vunpack.c.l.b16 %v339
        %v890 = vunpack.c.l.b16 %v340
        %v891 = vunpack.c.l.b16 %v341
        %v892 = vunpack.c.l.b16 %v342
        %v893 = vunpack.c.l.b16 %v343
        %v894 = vunpack.c.l.b16 %v344
        %v895 = vunpack.c.l.b16 %v345
        %v896 = vunpack.c.l.b16 %v346
        %v897 = vunpack.c.l.b16 %v347
        %v898 = vunpack.c.l.b16 %v348
        %v899 = vunpack.c.l.b16 %v349
        %v900 = vunpack.c.l.b16 %v350
        %v901 = vunpack.c.l.b16 %v351
        %v902 = vunpack.c.l.b16 %v352
        %v903 = vunpack.c.l.b16 %v353
        %v904 = vunpack.c.l.b16 %v354
        %v905 = vunpack.c.l.b16 %v355
        %v906 = vunpack.c.l.b16 %v356
        %v907 = vunpack.c.l.b16 %v357
        %v908 = vunpack.c.l.b16 %v358
        %v909 = vunpack.c.l.b16 %v359
        %v910 = vunpack.c.l.b16 %v360
        %v911 = vunpack.c.l.b16 %v361
        %v912 = vunpack.c.l.b16 %v362
        %v913 = vunpack.c.l.b16 %v363
        %v914 = vunpack.c.l.b16 %v364
        %v915 = vunpack.c.l.b16 %v365
        %v916 = vunpack.c.l.b16 %v366
        %v917 = vunpack.c.l.b16 %v367
        %v918 = vunpack.c.l.b16 %v368
        %v919 = vunpack.c.l.b16 %v369
        %v920 = vunpack.c.l.b16 %v370
        %v921 = vunpack.c.l.b16 %v371
        %v922 = vunpack.c.l.b16 %v372
        %v923 = vunpack.c.l.b16 %v373
        %v924 = vunpack.c.l.b16 %v374
        %v925 = vunpack.c.l.b16 %v375
        %v926 = vunpack.c.l.b16 %v376
        %v927 = vunpack.c.l.b16 %v377
        %v928 = vpack.c.b16 %v865, %v864
        %v929 = vpack.c.b16 %v867, %v866
        %v930 = vpack.c.b16 %v869, %v868
        %v931 = vpack.c.b16 %v871, %v870
        %v932 = vpack.c.b16 %v873, %v872
        %v933 = vpack.c.b16 %v875, %v874
        %v934 = vpack.c.b16 %v877, %v876
        %v935 = vpack.c.b16 %v879, %v878
        %v936 = vpack.c.b16 %v881, %v880
        %v937 = vpack.c.b16 %v883, %v882
        %v938 = vpack.c.b16 %v885, %v884
        %v939 = vpack.c.b16 %v887, %v886
        %v940 = vpack.c.b16 %v889, %v888
        %v941 = vpack.c.b16 %v891, %v890
        %v942 = vpack.c.b16 %v893, %v892
        %v943 = vpack.c.b16 %v895, %v894
        %v944 = vpack.c.b16 %v897, %v896
        %v945 = vpack.c.b16 %v899, %v898
        %v946 = vpack.c.b16 %v901, %v900
        %v947 = vpack.c.b16 %v903, %v902
        %v948 = vpack.c.b16 %v905, %v904
        %v949 = vpack.c.b16 %v907, %v906
        %v950 = vpack.c.b16 %v909, %v908
        %v951 = vpack.c.b16 %v911, %v910
        %v952 = vpack.c.b16 %v913, %v912
        %v953 = vpack.c.b16 %v915, %v914
        %v954 = vpack.c.b16 %v917, %v916
        %v955 = vpack.c.b16 %v919, %v918
        %v956 = vpack.c.b16 %v921, %v920
        %v957 = vpack.c.b16 %v923, %v922
        %v958 = vpack.c.b16 %v925, %v924
        %v959 = vpack.c.b16 %v927, %v926
        %992 = vmatprep.subr.bf16.mxu0 0
        %993 = vmatpush1.bf16.msra.mxu0 %v928
        %994 = vmatprep.subr.bf16.mxu0 0
        %995 = vmatpush1.bf16.msra.mxu0 %v929
        %996 = vmatprep.subr.bf16.mxu0 0
        %997 = vmatpush1.bf16.msra.mxu0 %v930
        %998 = vmatprep.subr.bf16.mxu0 0
        %999 = vmatpush1.bf16.msra.mxu0 %v931
        %1000 = vmatprep.subr.bf16.mxu0 0
        %1001 = vmatpush1.bf16.msra.mxu0 %v932
        %1002 = vmatprep.subr.bf16.mxu0 0
        %1003 = vmatpush1.bf16.msra.mxu0 %v933
        %1004 = vmatprep.subr.bf16.mxu0 0
        %1005 = vmatpush1.bf16.msra.mxu0 %v934
        %1006 = vmatprep.subr.bf16.mxu0 0
        %1007 = vmatpush1.bf16.msra.mxu0 %v935
        %1008 = vmatprep.subr.bf16.mxu0 0
        %1009 = vmatpush1.bf16.msra.mxu0 %v936
        %1010 = vmatprep.subr.bf16.mxu0 0
        %1011 = vmatpush1.bf16.msra.mxu0 %v937
        %1012 = vmatprep.subr.bf16.mxu0 0
        %1013 = vmatpush1.bf16.msra.mxu0 %v938
        %1014 = vmatprep.subr.bf16.mxu0 0
        %1015 = vmatpush1.bf16.msra.mxu0 %v939
        %1016 = vmatprep.subr.bf16.mxu0 0
        %1017 = vmatpush1.bf16.msra.mxu0 %v940
        %1018 = vmatprep.subr.bf16.mxu0 0
        %1019 = vmatpush1.bf16.msra.mxu0 %v941
        %1020 = vmatprep.subr.bf16.mxu0 0
        %1021 = vmatpush1.bf16.msra.mxu0 %v942
        %1022 = vmatprep.subr.bf16.mxu0 0
        %1023 = vmatpush1.bf16.msra.mxu0 %v943
        %1024 = vmatprep.mubr.bf16.mxu0 %v462
        %1025 = vmatmul.mubr.bf16.gmra.mrb[0].mxu0 %v461
        %v1026 = vpop.f32.mrb[0].mxu0
        %v1027 = vadd.f32 %v790, %v1026
        %v1028 = vpop.f32.mrb[0].mxu0
        %v1029 = vpop.f32.mrb[0].mxu0
        %v1030 = vadd.f32 %v793, %v1029
        %v1031 = vpop.f32.mrb[0].mxu0
        %1032 = vdwg.mxu0
        %1033 = vmatprep.subr.bf16.mxu0 0
        %1034 = vmatpush1.bf16.msra.mxu0 %v944
        %1035 = vmatprep.subr.bf16.mxu0 0
        %1036 = vmatpush1.bf16.msra.mxu0 %v945
        %1037 = vmatprep.subr.bf16.mxu0 0
        %1038 = vmatpush1.bf16.msra.mxu0 %v946
        %1039 = vmatprep.subr.bf16.mxu0 0
        %1040 = vmatpush1.bf16.msra.mxu0 %v947
        %1041 = vmatprep.subr.bf16.mxu0 0
        %1042 = vmatpush1.bf16.msra.mxu0 %v948
        %1043 = vmatprep.subr.bf16.mxu0 0
        %1044 = vmatpush1.bf16.msra.mxu0 %v949
        %1045 = vmatprep.subr.bf16.mxu0 0
        %1046 = vmatpush1.bf16.msra.mxu0 %v950
        %1047 = vmatprep.subr.bf16.mxu0 0
        %1048 = vmatpush1.bf16.msra.mxu0 %v951
        %1049 = vmatprep.subr.bf16.mxu0 0
        %1050 = vmatpush1.bf16.msra.mxu0 %v952
        %1051 = vmatprep.subr.bf16.mxu0 0
        %1052 = vmatpush1.bf16.msra.mxu0 %v953
        %1053 = vmatprep.subr.bf16.mxu0 0
        %1054 = vmatpush1.bf16.msra.mxu0 %v954
        %1055 = vmatprep.subr.bf16.mxu0 0
        %1056 = vmatpush1.bf16.msra.mxu0 %v955
        %1057 = vmatprep.subr.bf16.mxu0 0
        %1058 = vmatpush1.bf16.msra.mxu0 %v956
        %1059 = vmatprep.subr.bf16.mxu0 0
        %1060 = vmatpush1.bf16.msra.mxu0 %v957
        %1061 = vmatprep.subr.bf16.mxu0 0
        %1062 = vmatpush1.bf16.msra.mxu0 %v958
        %1063 = vmatprep.subr.bf16.mxu0 0
        %1064 = vmatpush1.bf16.msra.mxu0 %v959
        %1065 = vmatprep.mubr.bf16.mxu0 %v464
        %1066 = vmatmul.mubr.bf16.gmra.mrb[0].mxu0 %v463
        %v1067 = vpop.f32.mrb[0].mxu0
        %v1068 = vadd.f32 %v1027, %v1067
        %v1069 = vpop.f32.mrb[0].mxu0
        %v1070 = vpop.f32.mrb[0].mxu0
        %v1071 = vadd.f32 %v1030, %v1070
        %v1072 = vpop.f32.mrb[0].mxu0
        %1073 = vdwg.mxu0
        %s1074 = scalar_lea.vmem [#allocation2], 512
        %v1075 = vld [vmem:[%s1074] sm:$0xf]
        %v1076 = vld [vmem:[%s1074 + $0x4] sm:$0xf]
        %v1077 = vld [vmem:[%s1074 + $0x8] sm:$0xf]
        %v1078 = vld [vmem:[%s1074 + $0xc] sm:$0xf]
        %v1079 = vld [vmem:[%s1074 + $0x10] sm:$0xf]
        %v1080 = vld [vmem:[%s1074 + $0x14] sm:$0xf]
        %v1081 = vld [vmem:[%s1074 + $0x18] sm:$0xf]
        %v1082 = vld [vmem:[%s1074 + $0x1c] sm:$0xf]
        %v1083 = vld [vmem:[%s1074 + $0x20] sm:$0xf]
        %v1084 = vld [vmem:[%s1074 + $0x24] sm:$0xf]
        %v1085 = vld [vmem:[%s1074 + $0x28] sm:$0xf]
        %v1086 = vld [vmem:[%s1074 + $0x2c] sm:$0xf]
        %v1087 = vld [vmem:[%s1074 + $0x30] sm:$0xf]
        %v1088 = vld [vmem:[%s1074 + $0x34] sm:$0xf]
        %v1089 = vld [vmem:[%s1074 + $0x38] sm:$0xf]
        %v1090 = vld [vmem:[%s1074 + $0x3c] sm:$0xf]
        %v1091 = vld [vmem:[%s1074 + $0x40] sm:$0xf]
        %v1092 = vld [vmem:[%s1074 + $0x44] sm:$0xf]
        %v1093 = vld [vmem:[%s1074 + $0x48] sm:$0xf]
        %v1094 = vld [vmem:[%s1074 + $0x4c] sm:$0xf]
        %v1095 = vld [vmem:[%s1074 + $0x50] sm:$0xf]
        %v1096 = vld [vmem:[%s1074 + $0x54] sm:$0xf]
        %v1097 = vld [vmem:[%s1074 + $0x58] sm:$0xf]
        %v1098 = vld [vmem:[%s1074 + $0x5c] sm:$0xf]
        %v1099 = vld [vmem:[%s1074 + $0x60] sm:$0xf]
        %v1100 = vld [vmem:[%s1074 + $0x64] sm:$0xf]
        %v1101 = vld [vmem:[%s1074 + $0x68] sm:$0xf]
        %v1102 = vld [vmem:[%s1074 + $0x6c] sm:$0xf]
        %v1103 = vld [vmem:[%s1074 + $0x70] sm:$0xf]
        %v1104 = vld [vmem:[%s1074 + $0x74] sm:$0xf]
        %v1105 = vld [vmem:[%s1074 + $0x78] sm:$0xf]
        %v1106 = vld [vmem:[%s1074 + $0x7c] sm:$0xf]
        %v1107 = vld [vmem:[%s1074 + $0x80] sm:$0xf]
        %v1108 = vld [vmem:[%s1074 + $0x84] sm:$0xf]
        %v1109 = vld [vmem:[%s1074 + $0x88] sm:$0xf]
        %v1110 = vld [vmem:[%s1074 + $0x8c] sm:$0xf]
        %v1111 = vld [vmem:[%s1074 + $0x90] sm:$0xf]
        %v1112 = vld [vmem:[%s1074 + $0x94] sm:$0xf]
        %v1113 = vld [vmem:[%s1074 + $0x98] sm:$0xf]
        %v1114 = vld [vmem:[%s1074 + $0x9c] sm:$0xf]
        %v1115 = vld [vmem:[%s1074 + $0xa0] sm:$0xf]
        %v1116 = vld [vmem:[%s1074 + $0xa4] sm:$0xf]
        %v1117 = vld [vmem:[%s1074 + $0xa8] sm:$0xf]
        %v1118 = vld [vmem:[%s1074 + $0xac] sm:$0xf]
        %v1119 = vld [vmem:[%s1074 + $0xb0] sm:$0xf]
        %v1120 = vld [vmem:[%s1074 + $0xb4] sm:$0xf]
        %v1121 = vld [vmem:[%s1074 + $0xb8] sm:$0xf]
        %v1122 = vld [vmem:[%s1074 + $0xbc] sm:$0xf]
        %v1123 = vld [vmem:[%s1074 + $0xc0] sm:$0xf]
        %v1124 = vld [vmem:[%s1074 + $0xc4] sm:$0xf]
        %v1125 = vld [vmem:[%s1074 + $0xc8] sm:$0xf]
        %v1126 = vld [vmem:[%s1074 + $0xcc] sm:$0xf]
        %v1127 = vld [vmem:[%s1074 + $0xd0] sm:$0xf]
        %v1128 = vld [vmem:[%s1074 + $0xd4] sm:$0xf]
        %v1129 = vld [vmem:[%s1074 + $0xd8] sm:$0xf]
        %v1130 = vld [vmem:[%s1074 + $0xdc] sm:$0xf]
        %v1131 = vld [vmem:[%s1074 + $0xe0] sm:$0xf]
        %v1132 = vld [vmem:[%s1074 + $0xe4] sm:$0xf]
        %v1133 = vld [vmem:[%s1074 + $0xe8] sm:$0xf]
        %v1134 = vld [vmem:[%s1074 + $0xec] sm:$0xf]
        %v1135 = vld [vmem:[%s1074 + $0xf0] sm:$0xf]
        %v1136 = vld [vmem:[%s1074 + $0xf4] sm:$0xf]
        %v1137 = vld [vmem:[%s1074 + $0xf8] sm:$0xf]
        %v1138 = vld [vmem:[%s1074 + $0xfc] sm:$0xf]
        %vm1139 = vcmask 1046528
        %v1140 = vrot.slane %v461, 1
        %v1141 = vrot.slane %v465, 1
        %v1142 = vsel %vm1139, %v1140, %v1141
        %v1143 = vrot.slane %v462, 1
        %v1144 = vrot.slane %v466, 1
        %v1145 = vsel %vm1139, %v1143, %v1144
        %v1146 = vrot.slane %v463, 1
        %v1147 = vrot.slane %v467, 1
        %v1148 = vsel %vm1139, %v1146, %v1147
        %v1149 = vrot.slane %v464, 1
        %v1150 = vrot.slane %v468, 1
        %v1151 = vsel %vm1139, %v1149, %v1150
        %v1220 = vunpack.c.l.b16 %v1075
        %v1221 = vunpack.c.l.b16 %v1076
        %v1222 = vunpack.c.l.b16 %v1077
        %v1223 = vunpack.c.l.b16 %v1078
        %v1224 = vunpack.c.l.b16 %v1079
        %v1225 = vunpack.c.l.b16 %v1080
        %v1226 = vunpack.c.l.b16 %v1081
        %v1227 = vunpack.c.l.b16 %v1082
        %v1228 = vunpack.c.l.b16 %v1083
        %v1229 = vunpack.c.l.b16 %v1084
        %v1230 = vunpack.c.l.b16 %v1085
        %v1231 = vunpack.c.l.b16 %v1086
        %v1232 = vunpack.c.l.b16 %v1087
        %v1233 = vunpack.c.l.b16 %v1088
        %v1234 = vunpack.c.l.b16 %v1089
        %v1235 = vunpack.c.l.b16 %v1090
        %v1236 = vunpack.c.l.b16 %v1091
        %v1237 = vunpack.c.l.b16 %v1092
        %v1238 = vunpack.c.l.b16 %v1093
        %v1239 = vunpack.c.l.b16 %v1094
        %v1240 = vunpack.c.l.b16 %v1095
        %v1241 = vunpack.c.l.b16 %v1096
        %v1242 = vunpack.c.l.b16 %v1097
        %v1243 = vunpack.c.l.b16 %v1098
        %v1244 = vunpack.c.l.b16 %v1099
        %v1245 = vunpack.c.l.b16 %v1100
        %v1246 = vunpack.c.l.b16 %v1101
        %v1247 = vunpack.c.l.b16 %v1102
        %v1248 = vunpack.c.l.b16 %v1103
        %v1249 = vunpack.c.l.b16 %v1104
        %v1250 = vunpack.c.l.b16 %v1105
        %v1251 = vunpack.c.l.b16 %v1106
        %v1252 = vunpack.c.l.b16 %v1107
        %v1253 = vunpack.c.l.b16 %v1108
        %v1254 = vunpack.c.l.b16 %v1109
        %v1255 = vunpack.c.l.b16 %v1110
        %v1256 = vunpack.c.l.b16 %v1111
        %v1257 = vunpack.c.l.b16 %v1112
        %v1258 = vunpack.c.l.b16 %v1113
        %v1259 = vunpack.c.l.b16 %v1114
        %v1260 = vunpack.c.l.b16 %v1115
        %v1261 = vunpack.c.l.b16 %v1116
        %v1262 = vunpack.c.l.b16 %v1117
        %v1263 = vunpack.c.l.b16 %v1118
        %v1264 = vunpack.c.l.b16 %v1119
        %v1265 = vunpack.c.l.b16 %v1120
        %v1266 = vunpack.c.l.b16 %v1121
        %v1267 = vunpack.c.l.b16 %v1122
        %v1268 = vunpack.c.l.b16 %v1123
        %v1269 = vunpack.c.l.b16 %v1124
        %v1270 = vunpack.c.l.b16 %v1125
        %v1271 = vunpack.c.l.b16 %v1126
        %v1272 = vunpack.c.l.b16 %v1127
        %v1273 = vunpack.c.l.b16 %v1128
        %v1274 = vunpack.c.l.b16 %v1129
        %v1275 = vunpack.c.l.b16 %v1130
        %v1276 = vunpack.c.l.b16 %v1131
        %v1277 = vunpack.c.l.b16 %v1132
        %v1278 = vunpack.c.l.b16 %v1133
        %v1279 = vunpack.c.l.b16 %v1134
        %v1280 = vunpack.c.l.b16 %v1135
        %v1281 = vunpack.c.l.b16 %v1136
        %v1282 = vunpack.c.l.b16 %v1137
        %v1283 = vunpack.c.l.b16 %v1138
        %v1284 = vpack.c.b16 %v1221, %v1220
        %v1285 = vpack.c.b16 %v1223, %v1222
        %v1286 = vpack.c.b16 %v1225, %v1224
        %v1287 = vpack.c.b16 %v1227, %v1226
        %v1288 = vpack.c.b16 %v1229, %v1228
        %v1289 = vpack.c.b16 %v1231, %v1230
        %v1290 = vpack.c.b16 %v1233, %v1232
        %v1291 = vpack.c.b16 %v1235, %v1234
        %v1292 = vpack.c.b16 %v1237, %v1236
        %v1293 = vpack.c.b16 %v1239, %v1238
        %v1294 = vpack.c.b16 %v1241, %v1240
        %v1295 = vpack.c.b16 %v1243, %v1242
        %v1296 = vpack.c.b16 %v1245, %v1244
        %v1297 = vpack.c.b16 %v1247, %v1246
        %v1298 = vpack.c.b16 %v1249, %v1248
        %v1299 = vpack.c.b16 %v1251, %v1250
        %v1300 = vpack.c.b16 %v1253, %v1252
        %v1301 = vpack.c.b16 %v1255, %v1254
        %v1302 = vpack.c.b16 %v1257, %v1256
        %v1303 = vpack.c.b16 %v1259, %v1258
        %v1304 = vpack.c.b16 %v1261, %v1260
        %v1305 = vpack.c.b16 %v1263, %v1262
        %v1306 = vpack.c.b16 %v1265, %v1264
        %v1307 = vpack.c.b16 %v1267, %v1266
        %v1308 = vpack.c.b16 %v1269, %v1268
        %v1309 = vpack.c.b16 %v1271, %v1270
        %v1310 = vpack.c.b16 %v1273, %v1272
        %v1311 = vpack.c.b16 %v1275, %v1274
        %v1312 = vpack.c.b16 %v1277, %v1276
        %v1313 = vpack.c.b16 %v1279, %v1278
        %v1314 = vpack.c.b16 %v1281, %v1280
        %v1315 = vpack.c.b16 %v1283, %v1282
        %1348 = vmatprep.subr.bf16.mxu0 0
        %1349 = vmatpush1.bf16.msra.mxu0 %v1284
        %1350 = vmatprep.subr.bf16.mxu0 0
        %1351 = vmatpush1.bf16.msra.mxu0 %v1285
        %1352 = vmatprep.subr.bf16.mxu0 0
        %1353 = vmatpush1.bf16.msra.mxu0 %v1286
        %1354 = vmatprep.subr.bf16.mxu0 0
        %1355 = vmatpush1.bf16.msra.mxu0 %v1287
        %1356 = vmatprep.subr.bf16.mxu0 0
        %1357 = vmatpush1.bf16.msra.mxu0 %v1288
        %1358 = vmatprep.subr.bf16.mxu0 0
        %1359 = vmatpush1.bf16.msra.mxu0 %v1289
        %1360 = vmatprep.subr.bf16.mxu0 0
        %1361 = vmatpush1.bf16.msra.mxu0 %v1290
        %1362 = vmatprep.subr.bf16.mxu0 0
        %1363 = vmatpush1.bf16.msra.mxu0 %v1291
        %1364 = vmatprep.subr.bf16.mxu0 0
        %1365 = vmatpush1.bf16.msra.mxu0 %v1292
        %1366 = vmatprep.subr.bf16.mxu0 0
        %1367 = vmatpush1.bf16.msra.mxu0 %v1293
        %1368 = vmatprep.subr.bf16.mxu0 0
        %1369 = vmatpush1.bf16.msra.mxu0 %v1294
        %1370 = vmatprep.subr.bf16.mxu0 0
        %1371 = vmatpush1.bf16.msra.mxu0 %v1295
        %1372 = vmatprep.subr.bf16.mxu0 0
        %1373 = vmatpush1.bf16.msra.mxu0 %v1296
        %1374 = vmatprep.subr.bf16.mxu0 0
        %1375 = vmatpush1.bf16.msra.mxu0 %v1297
        %1376 = vmatprep.subr.bf16.mxu0 0
        %1377 = vmatpush1.bf16.msra.mxu0 %v1298
        %1378 = vmatprep.subr.bf16.mxu0 0
        %1379 = vmatpush1.bf16.msra.mxu0 %v1299
        %1380 = vmatprep.mubr.bf16.mxu0 %v1145
        %1381 = vmatmul.mubr.bf16.gmra.mrb[0].mxu0 %v1142
        %v1382 = vpop.f32.mrb[0].mxu0
        %v1383 = vadd.f32 0.0, %v1382
        %v1384 = vpop.f32.mrb[0].mxu0
        %v1385 = vpop.f32.mrb[0].mxu0
        %v1386 = vadd.f32 0.0, %v1385
        %v1387 = vpop.f32.mrb[0].mxu0
        %1388 = vdwg.mxu0
        %1389 = vmatprep.subr.bf16.mxu0 0
        %1390 = vmatpush1.bf16.msra.mxu0 %v1300
        %1391 = vmatprep.subr.bf16.mxu0 0
        %1392 = vmatpush1.bf16.msra.mxu0 %v1301
        %1393 = vmatprep.subr.bf16.mxu0 0
        %1394 = vmatpush1.bf16.msra.mxu0 %v1302
        %1395 = vmatprep.subr.bf16.mxu0 0
        %1396 = vmatpush1.bf16.msra.mxu0 %v1303
        %1397 = vmatprep.subr.bf16.mxu0 0
        %1398 = vmatpush1.bf16.msra.mxu0 %v1304
        %1399 = vmatprep.subr.bf16.mxu0 0
        %1400 = vmatpush1.bf16.msra.mxu0 %v1305
        %1401 = vmatprep.subr.bf16.mxu0 0
        %1402 = vmatpush1.bf16.msra.mxu0 %v1306
        %1403 = vmatprep.subr.bf16.mxu0 0
        %1404 = vmatpush1.bf16.msra.mxu0 %v1307
        %1405 = vmatprep.subr.bf16.mxu0 0
        %1406 = vmatpush1.bf16.msra.mxu0 %v1308
        %1407 = vmatprep.subr.bf16.mxu0 0
        %1408 = vmatpush1.bf16.msra.mxu0 %v1309
        %1409 = vmatprep.subr.bf16.mxu0 0
        %1410 = vmatpush1.bf16.msra.mxu0 %v1310
        %1411 = vmatprep.subr.bf16.mxu0 0
        %1412 = vmatpush1.bf16.msra.mxu0 %v1311
        %1413 = vmatprep.subr.bf16.mxu0 0
        %1414 = vmatpush1.bf16.msra.mxu0 %v1312
        %1415 = vmatprep.subr.bf16.mxu0 0
        %1416 = vmatpush1.bf16.msra.mxu0 %v1313
        %1417 = vmatprep.subr.bf16.mxu0 0
        %1418 = vmatpush1.bf16.msra.mxu0 %v1314
        %1419 = vmatprep.subr.bf16.mxu0 0
        %1420 = vmatpush1.bf16.msra.mxu0 %v1315
        %1421 = vmatprep.mubr.bf16.mxu0 %v1151
        %1422 = vmatmul.mubr.bf16.gmra.mrb[0].mxu0 %v1148
        %v1423 = vpop.f32.mrb[0].mxu0
        %v1424 = vadd.f32 %v1383, %v1423
        %v1425 = vpop.f32.mrb[0].mxu0
        %v1426 = vpop.f32.mrb[0].mxu0
        %v1427 = vadd.f32 %v1386, %v1426
        %v1428 = vpop.f32.mrb[0].mxu0
        %1429 = vdwg.mxu0
        %v1430 = vadd.f32 %v1068, %v1424
        %v1431 = vadd.f32 %v1071, %v1427
        %s1432 = scalar_lea.vmem [#allocation2], 768
        %v1433 = vld [vmem:[%s1432] sm:$0xf]
        %v1434 = vld [vmem:[%s1432 + $0x4] sm:$0xf]
        %v1435 = vld [vmem:[%s1432 + $0x8] sm:$0xf]
        %v1436 = vld [vmem:[%s1432 + $0xc] sm:$0xf]
        %v1437 = vld [vmem:[%s1432 + $0x10] sm:$0xf]
        %v1438 = vld [vmem:[%s1432 + $0x14] sm:$0xf]
        %v1439 = vld [vmem:[%s1432 + $0x18] sm:$0xf]
        %v1440 = vld [vmem:[%s1432 + $0x1c] sm:$0xf]
        %v1441 = vld [vmem:[%s1432 + $0x20] sm:$0xf]
        %v1442 = vld [vmem:[%s1432 + $0x24] sm:$0xf]
        %v1443 = vld [vmem:[%s1432 + $0x28] sm:$0xf]
        %v1444 = vld [vmem:[%s1432 + $0x2c] sm:$0xf]
        %v1445 = vld [vmem:[%s1432 + $0x30] sm:$0xf]
        %v1446 = vld [vmem:[%s1432 + $0x34] sm:$0xf]
        %v1447 = vld [vmem:[%s1432 + $0x38] sm:$0xf]
        %v1448 = vld [vmem:[%s1432 + $0x3c] sm:$0xf]
        %v1449 = vld [vmem:[%s1432 + $0x40] sm:$0xf]
        %v1450 = vld [vmem:[%s1432 + $0x44] sm:$0xf]
        %v1451 = vld [vmem:[%s1432 + $0x48] sm:$0xf]
        %v1452 = vld [vmem:[%s1432 + $0x4c] sm:$0xf]
        %v1453 = vld [vmem:[%s1432 + $0x50] sm:$0xf]
        %v1454 = vld [vmem:[%s1432 + $0x54] sm:$0xf]
        %v1455 = vld [vmem:[%s1432 + $0x58] sm:$0xf]
        %v1456 = vld [vmem:[%s1432 + $0x5c] sm:$0xf]
        %v1457 = vld [vmem:[%s1432 + $0x60] sm:$0xf]
        %v1458 = vld [vmem:[%s1432 + $0x64] sm:$0xf]
        %v1459 = vld [vmem:[%s1432 + $0x68] sm:$0xf]
        %v1460 = vld [vmem:[%s1432 + $0x6c] sm:$0xf]
        %v1461 = vld [vmem:[%s1432 + $0x70] sm:$0xf]
        %v1462 = vld [vmem:[%s1432 + $0x74] sm:$0xf]
        %v1463 = vld [vmem:[%s1432 + $0x78] sm:$0xf]
        %v1464 = vld [vmem:[%s1432 + $0x7c] sm:$0xf]
        %v1465 = vld [vmem:[%s1432 + $0x80] sm:$0xf]
        %v1466 = vld [vmem:[%s1432 + $0x84] sm:$0xf]
        %v1467 = vld [vmem:[%s1432 + $0x88] sm:$0xf]
        %v1468 = vld [vmem:[%s1432 + $0x8c] sm:$0xf]
        %v1469 = vld [vmem:[%s1432 + $0x90] sm:$0xf]
        %v1470 = vld [vmem:[%s1432 + $0x94] sm:$0xf]
        %v1471 = vld [vmem:[%s1432 + $0x98] sm:$0xf]
        %v1472 = vld [vmem:[%s1432 + $0x9c] sm:$0xf]
        %v1473 = vld [vmem:[%s1432 + $0xa0] sm:$0xf]
        %v1474 = vld [vmem:[%s1432 + $0xa4] sm:$0xf]
        %v1475 = vld [vmem:[%s1432 + $0xa8] sm:$0xf]
        %v1476 = vld [vmem:[%s1432 + $0xac] sm:$0xf]
        %v1477 = vld [vmem:[%s1432 + $0xb0] sm:$0xf]
        %v1478 = vld [vmem:[%s1432 + $0xb4] sm:$0xf]
        %v1479 = vld [vmem:[%s1432 + $0xb8] sm:$0xf]
        %v1480 = vld [vmem:[%s1432 + $0xbc] sm:$0xf]
        %v1481 = vld [vmem:[%s1432 + $0xc0] sm:$0xf]
        %v1482 = vld [vmem:[%s1432 + $0xc4] sm:$0xf]
        %v1483 = vld [vmem:[%s1432 + $0xc8] sm:$0xf]
        %v1484 = vld [vmem:[%s1432 + $0xcc] sm:$0xf]
        %v1485 = vld [vmem:[%s1432 + $0xd0] sm:$0xf]
        %v1486 = vld [vmem:[%s1432 + $0xd4] sm:$0xf]
        %v1487 = vld [vmem:[%s1432 + $0xd8] sm:$0xf]
        %v1488 = vld [vmem:[%s1432 + $0xdc] sm:$0xf]
        %v1489 = vld [vmem:[%s1432 + $0xe0] sm:$0xf]
        %v1490 = vld [vmem:[%s1432 + $0xe4] sm:$0xf]
        %v1491 = vld [vmem:[%s1432 + $0xe8] sm:$0xf]
        %v1492 = vld [vmem:[%s1432 + $0xec] sm:$0xf]
        %v1493 = vld [vmem:[%s1432 + $0xf0] sm:$0xf]
        %v1494 = vld [vmem:[%s1432 + $0xf4] sm:$0xf]
        %v1495 = vld [vmem:[%s1432 + $0xf8] sm:$0xf]
        %v1496 = vld [vmem:[%s1432 + $0xfc] sm:$0xf]
        %vm1497 = vsmask.f32 6400
        %v1498 = vrot.slane %v471, 1
        %v1499 = vrot.slane %v473, 2
        %v1500 = vor.u32 %v1498, %v1499
        %v1501 = vshrl.u32 %v465, 16
        %v1503 = vrot.slane %v1501, 1
        %v1504 = vrot.slane %v478, 2
        %v1505 = vor.u32 %v1503, %v1504
        %v1506 = vsel %vm1497, %v1500, %v1505
        %v1507 = vrot.slane %v483, 1
        %v1508 = vrot.slane %v485, 2
        %v1509 = vor.u32 %v1507, %v1508
        %v1510 = vshrl.u32 %v466, 16
        %v1512 = vrot.slane %v1510, 1
        %v1513 = vrot.slane %v490, 2
        %v1514 = vor.u32 %v1512, %v1513
        %v1515 = vsel %vm1497, %v1509, %v1514
        %v1516 = vrot.slane %v495, 1
        %v1517 = vrot.slane %v497, 2
        %v1518 = vor.u32 %v1516, %v1517
        %v1519 = vshrl.u32 %v467, 16
        %v1521 = vrot.slane %v1519, 1
        %v1522 = vrot.slane %v502, 2
        %v1523 = vor.u32 %v1521, %v1522
        %v1524 = vsel %vm1497, %v1518, %v1523
        %v1525 = vrot.slane %v507, 1
        %v1526 = vrot.slane %v509, 2
        %v1527 = vor.u32 %v1525, %v1526
        %v1528 = vshrl.u32 %v468, 16
        %v1530 = vrot.slane %v1528, 1
        %v1531 = vrot.slane %v514, 2
        %v1532 = vor.u32 %v1530, %v1531
        %v1533 = vsel %vm1497, %v1527, %v1532
        %v1602 = vunpack.c.l.b16 %v1433
        %v1603 = vunpack.c.l.b16 %v1434
        %v1604 = vunpack.c.l.b16 %v1435
        %v1605 = vunpack.c.l.b16 %v1436
        %v1606 = vunpack.c.l.b16 %v1437
        %v1607 = vunpack.c.l.b16 %v1438
        %v1608 = vunpack.c.l.b16 %v1439
        %v1609 = vunpack.c.l.b16 %v1440
        %v1610 = vunpack.c.l.b16 %v1441
        %v1611 = vunpack.c.l.b16 %v1442
        %v1612 = vunpack.c.l.b16 %v1443
        %v1613 = vunpack.c.l.b16 %v1444
        %v1614 = vunpack.c.l.b16 %v1445
        %v1615 = vunpack.c.l.b16 %v1446
        %v1616 = vunpack.c.l.b16 %v1447
        %v1617 = vunpack.c.l.b16 %v1448
        %v1618 = vunpack.c.l.b16 %v1449
        %v1619 = vunpack.c.l.b16 %v1450
        %v1620 = vunpack.c.l.b16 %v1451
        %v1621 = vunpack.c.l.b16 %v1452
        %v1622 = vunpack.c.l.b16 %v1453
        %v1623 = vunpack.c.l.b16 %v1454
        %v1624 = vunpack.c.l.b16 %v1455
        %v1625 = vunpack.c.l.b16 %v1456
        %v1626 = vunpack.c.l.b16 %v1457
        %v1627 = vunpack.c.l.b16 %v1458
        %v1628 = vunpack.c.l.b16 %v1459
        %v1629 = vunpack.c.l.b16 %v1460
        %v1630 = vunpack.c.l.b16 %v1461
        %v1631 = vunpack.c.l.b16 %v1462
        %v1632 = vunpack.c.l.b16 %v1463
        %v1633 = vunpack.c.l.b16 %v1464
        %v1634 = vunpack.c.l.b16 %v1465
        %v1635 = vunpack.c.l.b16 %v1466
        %v1636 = vunpack.c.l.b16 %v1467
        %v1637 = vunpack.c.l.b16 %v1468
        %v1638 = vunpack.c.l.b16 %v1469
        %v1639 = vunpack.c.l.b16 %v1470
        %v1640 = vunpack.c.l.b16 %v1471
        %v1641 = vunpack.c.l.b16 %v1472
        %v1642 = vunpack.c.l.b16 %v1473
        %v1643 = vunpack.c.l.b16 %v1474
        %v1644 = vunpack.c.l.b16 %v1475
        %v1645 = vunpack.c.l.b16 %v1476
        %v1646 = vunpack.c.l.b16 %v1477
        %v1647 = vunpack.c.l.b16 %v1478
        %v1648 = vunpack.c.l.b16 %v1479
        %v1649 = vunpack.c.l.b16 %v1480
        %v1650 = vunpack.c.l.b16 %v1481
        %v1651 = vunpack.c.l.b16 %v1482
        %v1652 = vunpack.c.l.b16 %v1483
        %v1653 = vunpack.c.l.b16 %v1484
        %v1654 = vunpack.c.l.b16 %v1485
        %v1655 = vunpack.c.l.b16 %v1486
        %v1656 = vunpack.c.l.b16 %v1487
        %v1657 = vunpack.c.l.b16 %v1488
        %v1658 = vunpack.c.l.b16 %v1489
        %v1659 = vunpack.c.l.b16 %v1490
        %v1660 = vunpack.c.l.b16 %v1491
        %v1661 = vunpack.c.l.b16 %v1492
        %v1662 = vunpack.c.l.b16 %v1493
        %v1663 = vunpack.c.l.b16 %v1494
        %v1664 = vunpack.c.l.b16 %v1495
        %v1665 = vunpack.c.l.b16 %v1496
        %v1666 = vpack.c.b16 %v1603, %v1602
        %v1667 = vpack.c.b16 %v1605, %v1604
        %v1668 = vpack.c.b16 %v1607, %v1606
        %v1669 = vpack.c.b16 %v1609, %v1608
        %v1670 = vpack.c.b16 %v1611, %v1610
        %v1671 = vpack.c.b16 %v1613, %v1612
        %v1672 = vpack.c.b16 %v1615, %v1614
        %v1673 = vpack.c.b16 %v1617, %v1616
        %v1674 = vpack.c.b16 %v1619, %v1618
        %v1675 = vpack.c.b16 %v1621, %v1620
        %v1676 = vpack.c.b16 %v1623, %v1622
        %v1677 = vpack.c.b16 %v1625, %v1624
        %v1678 = vpack.c.b16 %v1627, %v1626
        %v1679 = vpack.c.b16 %v1629, %v1628
        %v1680 = vpack.c.b16 %v1631, %v1630
        %v1681 = vpack.c.b16 %v1633, %v1632
        %v1682 = vpack.c.b16 %v1635, %v1634
        %v1683 = vpack.c.b16 %v1637, %v1636
        %v1684 = vpack.c.b16 %v1639, %v1638
        %v1685 = vpack.c.b16 %v1641, %v1640
        %v1686 = vpack.c.b16 %v1643, %v1642
        %v1687 = vpack.c.b16 %v1645, %v1644
        %v1688 = vpack.c.b16 %v1647, %v1646
        %v1689 = vpack.c.b16 %v1649, %v1648
        %v1690 = vpack.c.b16 %v1651, %v1650
        %v1691 = vpack.c.b16 %v1653, %v1652
        %v1692 = vpack.c.b16 %v1655, %v1654
        %v1693 = vpack.c.b16 %v1657, %v1656
        %v1694 = vpack.c.b16 %v1659, %v1658
        %v1695 = vpack.c.b16 %v1661, %v1660
        %v1696 = vpack.c.b16 %v1663, %v1662
        %v1697 = vpack.c.b16 %v1665, %v1664
        %1730 = vmatprep.subr.bf16.mxu0 0
        %1731 = vmatpush1.bf16.msra.mxu0 %v1666
        %1732 = vmatprep.subr.bf16.mxu0 0
        %1733 = vmatpush1.bf16.msra.mxu0 %v1667
        %1734 = vmatprep.subr.bf16.mxu0 0
        %1735 = vmatpush1.bf16.msra.mxu0 %v1668
        %1736 = vmatprep.subr.bf16.mxu0 0
        %1737 = vmatpush1.bf16.msra.mxu0 %v1669
        %1738 = vmatprep.subr.bf16.mxu0 0
        %1739 = vmatpush1.bf16.msra.mxu0 %v1670
        %1740 = vmatprep.subr.bf16.mxu0 0
        %1741 = vmatpush1.bf16.msra.mxu0 %v1671
        %1742 = vmatprep.subr.bf16.mxu0 0
        %1743 = vmatpush1.bf16.msra.mxu0 %v1672
        %1744 = vmatprep.subr.bf16.mxu0 0
        %1745 = vmatpush1.bf16.msra.mxu0 %v1673
        %1746 = vmatprep.subr.bf16.mxu0 0
        %1747 = vmatpush1.bf16.msra.mxu0 %v1674
        %1748 = vmatprep.subr.bf16.mxu0 0
        %1749 = vmatpush1.bf16.msra.mxu0 %v1675
        %1750 = vmatprep.subr.bf16.mxu0 0
        %1751 = vmatpush1.bf16.msra.mxu0 %v1676
        %1752 = vmatprep.subr.bf16.mxu0 0
        %1753 = vmatpush1.bf16.msra.mxu0 %v1677
        %1754 = vmatprep.subr.bf16.mxu0 0
        %1755 = vmatpush1.bf16.msra.mxu0 %v1678
        %1756 = vmatprep.subr.bf16.mxu0 0
        %1757 = vmatpush1.bf16.msra.mxu0 %v1679
        %1758 = vmatprep.subr.bf16.mxu0 0
        %1759 = vmatpush1.bf16.msra.mxu0 %v1680
        %1760 = vmatprep.subr.bf16.mxu0 0
        %1761 = vmatpush1.bf16.msra.mxu0 %v1681
        %1762 = vmatprep.mubr.bf16.mxu0 %v1515
        %1763 = vmatmul.mubr.bf16.gmra.mrb[0].mxu0 %v1506
        %v1764 = vpop.f32.mrb[0].mxu0
        %v1765 = vadd.f32 0.0, %v1764
        %v1766 = vpop.f32.mrb[0].mxu0
        %v1767 = vpop.f32.mrb[0].mxu0
        %v1768 = vadd.f32 0.0, %v1767
        %v1769 = vpop.f32.mrb[0].mxu0
        %1770 = vdwg.mxu0
        %1771 = vmatprep.subr.bf16.mxu0 0
        %1772 = vmatpush1.bf16.msra.mxu0 %v1682
        %1773 = vmatprep.subr.bf16.mxu0 0
        %1774 = vmatpush1.bf16.msra.mxu0 %v1683
        %1775 = vmatprep.subr.bf16.mxu0 0
        %1776 = vmatpush1.bf16.msra.mxu0 %v1684
        %1777 = vmatprep.subr.bf16.mxu0 0
        %1778 = vmatpush1.bf16.msra.mxu0 %v1685
        %1779 = vmatprep.subr.bf16.mxu0 0
        %1780 = vmatpush1.bf16.msra.mxu0 %v1686
        %1781 = vmatprep.subr.bf16.mxu0 0
        %1782 = vmatpush1.bf16.msra.mxu0 %v1687
        %1783 = vmatprep.subr.bf16.mxu0 0
        %1784 = vmatpush1.bf16.msra.mxu0 %v1688
        %1785 = vmatprep.subr.bf16.mxu0 0
        %1786 = vmatpush1.bf16.msra.mxu0 %v1689
        %1787 = vmatprep.subr.bf16.mxu0 0
        %1788 = vmatpush1.bf16.msra.mxu0 %v1690
        %1789 = vmatprep.subr.bf16.mxu0 0
        %1790 = vmatpush1.bf16.msra.mxu0 %v1691
        %1791 = vmatprep.subr.bf16.mxu0 0
        %1792 = vmatpush1.bf16.msra.mxu0 %v1692
        %1793 = vmatprep.subr.bf16.mxu0 0
        %1794 = vmatpush1.bf16.msra.mxu0 %v1693
        %1795 = vmatprep.subr.bf16.mxu0 0
        %1796 = vmatpush1.bf16.msra.mxu0 %v1694
        %1797 = vmatprep.subr.bf16.mxu0 0
        %1798 = vmatpush1.bf16.msra.mxu0 %v1695
        %1799 = vmatprep.subr.bf16.mxu0 0
        %1800 = vmatpush1.bf16.msra.mxu0 %v1696
        %1801 = vmatprep.subr.bf16.mxu0 0
        %1802 = vmatpush1.bf16.msra.mxu0 %v1697
        %1803 = vmatprep.mubr.bf16.mxu0 %v1533
        %1804 = vmatmul.mubr.bf16.gmra.mrb[0].mxu0 %v1524
        %v1805 = vpop.f32.mrb[0].mxu0
        %v1806 = vadd.f32 %v1765, %v1805
        %v1807 = vpop.f32.mrb[0].mxu0
        %v1808 = vpop.f32.mrb[0].mxu0
        %v1809 = vadd.f32 %v1768, %v1808
        %v1810 = vpop.f32.mrb[0].mxu0
        %1811 = vdwg.mxu0
        %v1812 = vadd.f32 %v1430, %v1806
        %v1813 = vadd.f32 %v1431, %v1809
        %s1814 = scalar_lea.vmem [#allocation2], 1024
        %v1815 = vld [vmem:[%s1814] sm:$0xf]
        %v1816 = vld [vmem:[%s1814 + $0x4] sm:$0xf]
        %v1817 = vld [vmem:[%s1814 + $0x8] sm:$0xf]
        %v1818 = vld [vmem:[%s1814 + $0xc] sm:$0xf]
        %v1819 = vld [vmem:[%s1814 + $0x10] sm:$0xf]
        %v1820 = vld [vmem:[%s1814 + $0x14] sm:$0xf]
        %v1821 = vld [vmem:[%s1814 + $0x18] sm:$0xf]
        %v1822 = vld [vmem:[%s1814 + $0x1c] sm:$0xf]
        %v1823 = vld [vmem:[%s1814 + $0x20] sm:$0xf]
        %v1824 = vld [vmem:[%s1814 + $0x24] sm:$0xf]
        %v1825 = vld [vmem:[%s1814 + $0x28] sm:$0xf]
        %v1826 = vld [vmem:[%s1814 + $0x2c] sm:$0xf]
        %v1827 = vld [vmem:[%s1814 + $0x30] sm:$0xf]
        %v1828 = vld [vmem:[%s1814 + $0x34] sm:$0xf]
        %v1829 = vld [vmem:[%s1814 + $0x38] sm:$0xf]
        %v1830 = vld [vmem:[%s1814 + $0x3c] sm:$0xf]
        %v1831 = vld [vmem:[%s1814 + $0x40] sm:$0xf]
        %v1832 = vld [vmem:[%s1814 + $0x44] sm:$0xf]
        %v1833 = vld [vmem:[%s1814 + $0x48] sm:$0xf]
        %v1834 = vld [vmem:[%s1814 + $0x4c] sm:$0xf]
        %v1835 = vld [vmem:[%s1814 + $0x50] sm:$0xf]
        %v1836 = vld [vmem:[%s1814 + $0x54] sm:$0xf]
        %v1837 = vld [vmem:[%s1814 + $0x58] sm:$0xf]
        %v1838 = vld [vmem:[%s1814 + $0x5c] sm:$0xf]
        %v1839 = vld [vmem:[%s1814 + $0x60] sm:$0xf]
        %v1840 = vld [vmem:[%s1814 + $0x64] sm:$0xf]
        %v1841 = vld [vmem:[%s1814 + $0x68] sm:$0xf]
        %v1842 = vld [vmem:[%s1814 + $0x6c] sm:$0xf]
        %v1843 = vld [vmem:[%s1814 + $0x70] sm:$0xf]
        %v1844 = vld [vmem:[%s1814 + $0x74] sm:$0xf]
        %v1845 = vld [vmem:[%s1814 + $0x78] sm:$0xf]
        %v1846 = vld [vmem:[%s1814 + $0x7c] sm:$0xf]
        %v1847 = vld [vmem:[%s1814 + $0x80] sm:$0xf]
        %v1848 = vld [vmem:[%s1814 + $0x84] sm:$0xf]
        %v1849 = vld [vmem:[%s1814 + $0x88] sm:$0xf]
        %v1850 = vld [vmem:[%s1814 + $0x8c] sm:$0xf]
        %v1851 = vld [vmem:[%s1814 + $0x90] sm:$0xf]
        %v1852 = vld [vmem:[%s1814 + $0x94] sm:$0xf]
        %v1853 = vld [vmem:[%s1814 + $0x98] sm:$0xf]
        %v1854 = vld [vmem:[%s1814 + $0x9c] sm:$0xf]
        %v1855 = vld [vmem:[%s1814 + $0xa0] sm:$0xf]
        %v1856 = vld [vmem:[%s1814 + $0xa4] sm:$0xf]
        %v1857 = vld [vmem:[%s1814 + $0xa8] sm:$0xf]
        %v1858 = vld [vmem:[%s1814 + $0xac] sm:$0xf]
        %v1859 = vld [vmem:[%s1814 + $0xb0] sm:$0xf]
        %v1860 = vld [vmem:[%s1814 + $0xb4] sm:$0xf]
        %v1861 = vld [vmem:[%s1814 + $0xb8] sm:$0xf]
        %v1862 = vld [vmem:[%s1814 + $0xbc] sm:$0xf]
        %v1863 = vld [vmem:[%s1814 + $0xc0] sm:$0xf]
        %v1864 = vld [vmem:[%s1814 + $0xc4] sm:$0xf]
        %v1865 = vld [vmem:[%s1814 + $0xc8] sm:$0xf]
        %v1866 = vld [vmem:[%s1814 + $0xcc] sm:$0xf]
        %v1867 = vld [vmem:[%s1814 + $0xd0] sm:$0xf]
        %v1868 = vld [vmem:[%s1814 + $0xd4] sm:$0xf]
        %v1869 = vld [vmem:[%s1814 + $0xd8] sm:$0xf]
        %v1870 = vld [vmem:[%s1814 + $0xdc] sm:$0xf]
        %v1871 = vld [vmem:[%s1814 + $0xe0] sm:$0xf]
        %v1872 = vld [vmem:[%s1814 + $0xe4] sm:$0xf]
        %v1873 = vld [vmem:[%s1814 + $0xe8] sm:$0xf]
        %v1874 = vld [vmem:[%s1814 + $0xec] sm:$0xf]
        %v1875 = vld [vmem:[%s1814 + $0xf0] sm:$0xf]
        %v1876 = vld [vmem:[%s1814 + $0xf4] sm:$0xf]
        %v1877 = vld [vmem:[%s1814 + $0xf8] sm:$0xf]
        %v1878 = vld [vmem:[%s1814 + $0xfc] sm:$0xf]
        %vm1879 = vcmask 1045504
        %v1880 = vrot.slane %v461, 2
        %v1881 = vrot.slane %v465, 2
        %v1882 = vsel %vm1879, %v1880, %v1881
        %v1883 = vrot.slane %v462, 2
        %v1884 = vrot.slane %v466, 2
        %v1885 = vsel %vm1879, %v1883, %v1884
        %v1886 = vrot.slane %v463, 2
        %v1887 = vrot.slane %v467, 2
        %v1888 = vsel %vm1879, %v1886, %v1887
        %v1889 = vrot.slane %v464, 2
        %v1890 = vrot.slane %v468, 2
        %v1891 = vsel %vm1879, %v1889, %v1890
        %v1960 = vunpack.c.l.b16 %v1815
        %v1961 = vunpack.c.l.b16 %v1816
        %v1962 = vunpack.c.l.b16 %v1817
        %v1963 = vunpack.c.l.b16 %v1818
        %v1964 = vunpack.c.l.b16 %v1819
        %v1965 = vunpack.c.l.b16 %v1820
        %v1966 = vunpack.c.l.b16 %v1821
        %v1967 = vunpack.c.l.b16 %v1822
        %v1968 = vunpack.c.l.b16 %v1823
        %v1969 = vunpack.c.l.b16 %v1824
        %v1970 = vunpack.c.l.b16 %v1825
        %v1971 = vunpack.c.l.b16 %v1826
        %v1972 = vunpack.c.l.b16 %v1827
        %v1973 = vunpack.c.l.b16 %v1828
        %v1974 = vunpack.c.l.b16 %v1829
        %v1975 = vunpack.c.l.b16 %v1830
        %v1976 = vunpack.c.l.b16 %v1831
        %v1977 = vunpack.c.l.b16 %v1832
        %v1978 = vunpack.c.l.b16 %v1833
        %v1979 = vunpack.c.l.b16 %v1834
        %v1980 = vunpack.c.l.b16 %v1835
        %v1981 = vunpack.c.l.b16 %v1836
        %v1982 = vunpack.c.l.b16 %v1837
        %v1983 = vunpack.c.l.b16 %v1838
        %v1984 = vunpack.c.l.b16 %v1839
        %v1985 = vunpack.c.l.b16 %v1840
        %v1986 = vunpack.c.l.b16 %v1841
        %v1987 = vunpack.c.l.b16 %v1842
        %v1988 = vunpack.c.l.b16 %v1843
        %v1989 = vunpack.c.l.b16 %v1844
        %v1990 = vunpack.c.l.b16 %v1845
        %v1991 = vunpack.c.l.b16 %v1846
        %v1992 = vunpack.c.l.b16 %v1847
        %v1993 = vunpack.c.l.b16 %v1848
        %v1994 = vunpack.c.l.b16 %v1849
        %v1995 = vunpack.c.l.b16 %v1850
        %v1996 = vunpack.c.l.b16 %v1851
        %v1997 = vunpack.c.l.b16 %v1852
        %v1998 = vunpack.c.l.b16 %v1853
        %v1999 = vunpack.c.l.b16 %v1854
        %v2000 = vunpack.c.l.b16 %v1855
        %v2001 = vunpack.c.l.b16 %v1856
        %v2002 = vunpack.c.l.b16 %v1857
        %v2003 = vunpack.c.l.b16 %v1858
        %v2004 = vunpack.c.l.b16 %v1859
        %v2005 = vunpack.c.l.b16 %v1860
        %v2006 = vunpack.c.l.b16 %v1861
        %v2007 = vunpack.c.l.b16 %v1862
        %v2008 = vunpack.c.l.b16 %v1863
        %v2009 = vunpack.c.l.b16 %v1864
        %v2010 = vunpack.c.l.b16 %v1865
        %v2011 = vunpack.c.l.b16 %v1866
        %v2012 = vunpack.c.l.b16 %v1867
        %v2013 = vunpack.c.l.b16 %v1868
        %v2014 = vunpack.c.l.b16 %v1869
        %v2015 = vunpack.c.l.b16 %v1870
        %v2016 = vunpack.c.l.b16 %v1871
        %v2017 = vunpack.c.l.b16 %v1872
        %v2018 = vunpack.c.l.b16 %v1873
        %v2019 = vunpack.c.l.b16 %v1874
        %v2020 = vunpack.c.l.b16 %v1875
        %v2021 = vunpack.c.l.b16 %v1876
        %v2022 = vunpack.c.l.b16 %v1877
        %v2023 = vunpack.c.l.b16 %v1878
        %v2024 = vpack.c.b16 %v1961, %v1960
        %v2025 = vpack.c.b16 %v1963, %v1962
        %v2026 = vpack.c.b16 %v1965, %v1964
        %v2027 = vpack.c.b16 %v1967, %v1966
        %v2028 = vpack.c.b16 %v1969, %v1968
        %v2029 = vpack.c.b16 %v1971, %v1970
        %v2030 = vpack.c.b16 %v1973, %v1972
        %v2031 = vpack.c.b16 %v1975, %v1974
        %v2032 = vpack.c.b16 %v1977, %v1976
        %v2033 = vpack.c.b16 %v1979, %v1978
        %v2034 = vpack.c.b16 %v1981, %v1980
        %v2035 = vpack.c.b16 %v1983, %v1982
        %v2036 = vpack.c.b16 %v1985, %v1984
        %v2037 = vpack.c.b16 %v1987, %v1986
        %v2038 = vpack.c.b16 %v1989, %v1988
        %v2039 = vpack.c.b16 %v1991, %v1990
        %v2040 = vpack.c.b16 %v1993, %v1992
        %v2041 = vpack.c.b16 %v1995, %v1994
        %v2042 = vpack.c.b16 %v1997, %v1996
        %v2043 = vpack.c.b16 %v1999, %v1998
        %v2044 = vpack.c.b16 %v2001, %v2000
        %v2045 = vpack.c.b16 %v2003, %v2002
        %v2046 = vpack.c.b16 %v2005, %v2004
        %v2047 = vpack.c.b16 %v2007, %v2006
        %v2048 = vpack.c.b16 %v2009, %v2008
        %v2049 = vpack.c.b16 %v2011, %v2010
        %v2050 = vpack.c.b16 %v2013, %v2012
        %v2051 = vpack.c.b16 %v2015, %v2014
        %v2052 = vpack.c.b16 %v2017, %v2016
        %v2053 = vpack.c.b16 %v2019, %v2018
        %v2054 = vpack.c.b16 %v2021, %v2020
        %v2055 = vpack.c.b16 %v2023, %v2022
        %2088 = vmatprep.subr.bf16.mxu0 0
        %2089 = vmatpush1.bf16.msra.mxu0 %v2024
        %2090 = vmatprep.subr.bf16.mxu0 0
        %2091 = vmatpush1.bf16.msra.mxu0 %v2025
        %2092 = vmatprep.subr.bf16.mxu0 0
        %2093 = vmatpush1.bf16.msra.mxu0 %v2026
        %2094 = vmatprep.subr.bf16.mxu0 0
        %2095 = vmatpush1.bf16.msra.mxu0 %v2027
        %2096 = vmatprep.subr.bf16.mxu0 0
        %2097 = vmatpush1.bf16.msra.mxu0 %v2028
        %2098 = vmatprep.subr.bf16.mxu0 0
        %2099 = vmatpush1.bf16.msra.mxu0 %v2029
        %2100 = vmatprep.subr.bf16.mxu0 0
        %2101 = vmatpush1.bf16.msra.mxu0 %v2030
        %2102 = vmatprep.subr.bf16.mxu0 0
        %2103 = vmatpush1.bf16.msra.mxu0 %v2031
        %2104 = vmatprep.subr.bf16.mxu0 0
        %2105 = vmatpush1.bf16.msra.mxu0 %v2032
        %2106 = vmatprep.subr.bf16.mxu0 0
        %2107 = vmatpush1.bf16.msra.mxu0 %v2033
        %2108 = vmatprep.subr.bf16.mxu0 0
        %2109 = vmatpush1.bf16.msra.mxu0 %v2034
        %2110 = vmatprep.subr.bf16.mxu0 0
        %2111 = vmatpush1.bf16.msra.mxu0 %v2035
        %2112 = vmatprep.subr.bf16.mxu0 0
        %2113 = vmatpush1.bf16.msra.mxu0 %v2036
        %2114 = vmatprep.subr.bf16.mxu0 0
        %2115 = vmatpush1.bf16.msra.mxu0 %v2037
        %2116 = vmatprep.subr.bf16.mxu0 0
        %2117 = vmatpush1.bf16.msra.mxu0 %v2038
        %2118 = vmatprep.subr.bf16.mxu0 0
        %2119 = vmatpush1.bf16.msra.mxu0 %v2039
        %2120 = vmatprep.mubr.bf16.mxu0 %v1885
        %2121 = vmatmul.mubr.bf16.gmra.mrb[0].mxu0 %v1882
        %v2122 = vpop.f32.mrb[0].mxu0
        %v2123 = vadd.f32 0.0, %v2122
        %v2124 = vpop.f32.mrb[0].mxu0
        %v2125 = vpop.f32.mrb[0].mxu0
        %v2126 = vadd.f32 0.0, %v2125
        %v2127 = vpop.f32.mrb[0].mxu0
        %2128 = vdwg.mxu0
        %2129 = vmatprep.subr.bf16.mxu0 0
        %2130 = vmatpush1.bf16.msra.mxu0 %v2040
        %2131 = vmatprep.subr.bf16.mxu0 0
        %2132 = vmatpush1.bf16.msra.mxu0 %v2041
        %2133 = vmatprep.subr.bf16.mxu0 0
        %2134 = vmatpush1.bf16.msra.mxu0 %v2042
        %2135 = vmatprep.subr.bf16.mxu0 0
        %2136 = vmatpush1.bf16.msra.mxu0 %v2043
        %2137 = vmatprep.subr.bf16.mxu0 0
        %2138 = vmatpush1.bf16.msra.mxu0 %v2044
        %2139 = vmatprep.subr.bf16.mxu0 0
        %2140 = vmatpush1.bf16.msra.mxu0 %v2045
        %2141 = vmatprep.subr.bf16.mxu0 0
        %2142 = vmatpush1.bf16.msra.mxu0 %v2046
        %2143 = vmatprep.subr.bf16.mxu0 0
        %2144 = vmatpush1.bf16.msra.mxu0 %v2047
        %2145 = vmatprep.subr.bf16.mxu0 0
        %2146 = vmatpush1.bf16.msra.mxu0 %v2048
        %2147 = vmatprep.subr.bf16.mxu0 0
        %2148 = vmatpush1.bf16.msra.mxu0 %v2049
        %2149 = vmatprep.subr.bf16.mxu0 0
        %2150 = vmatpush1.bf16.msra.mxu0 %v2050
        %2151 = vmatprep.subr.bf16.mxu0 0
        %2152 = vmatpush1.bf16.msra.mxu0 %v2051
        %2153 = vmatprep.subr.bf16.mxu0 0
        %2154 = vmatpush1.bf16.msra.mxu0 %v2052
        %2155 = vmatprep.subr.bf16.mxu0 0
        %2156 = vmatpush1.bf16.msra.mxu0 %v2053
        %2157 = vmatprep.subr.bf16.mxu0 0
        %2158 = vmatpush1.bf16.msra.mxu0 %v2054
        %2159 = vmatprep.subr.bf16.mxu0 0
        %2160 = vmatpush1.bf16.msra.mxu0 %v2055
        %2161 = vmatprep.mubr.bf16.mxu0 %v1891
        %2162 = vmatmul.mubr.bf16.gmra.mrb[0].mxu0 %v1888
        %v2163 = vpop.f32.mrb[0].mxu0
        %v2164 = vadd.f32 %v2123, %v2163
        %v2165 = vpop.f32.mrb[0].mxu0
        %v2166 = vpop.f32.mrb[0].mxu0
        %v2167 = vadd.f32 %v2126, %v2166
        %v2168 = vpop.f32.mrb[0].mxu0
        %2169 = vdwg.mxu0
        %v2170 = vadd.f32 %v1812, %v2164
        %v2171 = vadd.f32 %v1813, %v2167
        %v2172 = vld [vmem:[%s2] sm:$0x1]
        %v2174 = vlaneseq
        %v2175 = vshrl.u32 %v2174, 7
        %v2176 = vsub.s32 0, %v2175
        %v2177 = vrot.slane %v2172, %v2176
        %v2179 = vadd.f32 %v2170, %v2177
        %v2180 = vadd.f32 %v2171, %v2177
        %v2181 = vmul.f32 %v2179, 0.75
        %v2182 = vmul.f32 %v2180, 0.75
        %vm2185 = vcmask 1040384
        %v2186 = vrot.slane %v2179, 7
        %v2187 = vrot.slane %v2180, 7
        %v2188 = vsel %vm2185, %v2186, %v2187
        %v2191 = vsel %vm2185, %v2179, %v2186
        %v2192 = vmul.f32 %v2191, 0.25
        %v2193 = vmul.f32 %v2188, 0.25
        %v2194 = vadd.f32 %v2181, %v2192
        %v2195 = vadd.f32 %v2182, %v2193
        %vm2196 = vcmask 1046528
        %v2197 = vrot.slane %v2179, 1
        %v2198 = vrot.slane %v2180, 1
        %v2199 = vsel %vm2196, %v2197, %v2198
        %v2202 = vsel %vm2196, %v2198, %v2180
        %v2203 = vmul.f32 %v2199, 0.25
        %v2204 = vmul.f32 %v2202, 0.25
        %v2205 = vadd.f32 %v2181, %v2203
        %v2206 = vadd.f32 %v2182, %v2204
        %v2207 = vpack.c.bf16 %v2195, %v2194
        %v2208 = vpack.c.bf16 %v2206, %v2205
        %v2210 = vshrl.u32 %v2207, 16
        %v2212 = vrot.slane %v2210, 7
        %v2213 = vshll.u32 %v2207, 16
        %v2215 = vor.u32 %v2212, %v2213
        %vm2217 = vcmask 1040384
        %vm2218 = vsmask.f32 256
        %vm2219 = vmand %vm2217, %vm2218
        %v2220 = vsel %vm2219, 0, %v2215
        %v2222 = vshrl.u32 %v2208, 16
        %v2224 = vrot.slane %v2222, 7
        %v2225 = vshll.u32 %v2208, 16
        %v2227 = vor.u32 %v2224, %v2225
        %v2229 = vsel %vm2219, 0, %v2227
        %v2230 = vrot.slane %v2213, 1
        %v2231 = vor.u32 %v2210, %v2230
        %vm2233 = vcmask 1047552
        %vm2234 = vmand %vm2233, %vm469
        %v2235 = vsel %vm2234, %v2231, 0
        %v2236 = vrot.slane %v2225, 1
        %v2237 = vor.u32 %v2222, %v2236
        %v2239 = vsel %vm2234, %v2237, 0
        %v2240 = vld [vmem:[#allocation5] sm:$0xf]
        %v2241 = vld [vmem:[#allocation5 + $0x4] sm:$0xf]
        %v2242 = vld [vmem:[#allocation5 + $0x8] sm:$0xf]
        %v2243 = vld [vmem:[#allocation5 + $0xc] sm:$0xf]
        %v2244 = vld [vmem:[#allocation5 + $0x10] sm:$0xf]
        %v2245 = vld [vmem:[#allocation5 + $0x14] sm:$0xf]
        %v2246 = vld [vmem:[#allocation5 + $0x18] sm:$0xf]
        %v2247 = vld [vmem:[#allocation5 + $0x1c] sm:$0xf]
        %v2248 = vld [vmem:[#allocation5 + $0x20] sm:$0xf]
        %v2249 = vld [vmem:[#allocation5 + $0x24] sm:$0xf]
        %v2250 = vld [vmem:[#allocation5 + $0x28] sm:$0xf]
        %v2251 = vld [vmem:[#allocation5 + $0x2c] sm:$0xf]
        %v2252 = vld [vmem:[#allocation5 + $0x30] sm:$0xf]
        %v2253 = vld [vmem:[#allocation5 + $0x34] sm:$0xf]
        %v2254 = vld [vmem:[#allocation5 + $0x38] sm:$0xf]
        %v2255 = vld [vmem:[#allocation5 + $0x3c] sm:$0xf]
        %v2256 = vld [vmem:[#allocation5 + $0x40] sm:$0xf]
        %v2257 = vld [vmem:[#allocation5 + $0x44] sm:$0xf]
        %v2258 = vld [vmem:[#allocation5 + $0x48] sm:$0xf]
        %v2259 = vld [vmem:[#allocation5 + $0x4c] sm:$0xf]
        %v2260 = vld [vmem:[#allocation5 + $0x50] sm:$0xf]
        %v2261 = vld [vmem:[#allocation5 + $0x54] sm:$0xf]
        %v2262 = vld [vmem:[#allocation5 + $0x58] sm:$0xf]
        %v2263 = vld [vmem:[#allocation5 + $0x5c] sm:$0xf]
        %v2264 = vld [vmem:[#allocation5 + $0x60] sm:$0xf]
        %v2265 = vld [vmem:[#allocation5 + $0x64] sm:$0xf]
        %v2266 = vld [vmem:[#allocation5 + $0x68] sm:$0xf]
        %v2267 = vld [vmem:[#allocation5 + $0x6c] sm:$0xf]
        %v2268 = vld [vmem:[#allocation5 + $0x70] sm:$0xf]
        %v2269 = vld [vmem:[#allocation5 + $0x74] sm:$0xf]
        %v2270 = vld [vmem:[#allocation5 + $0x78] sm:$0xf]
        %v2271 = vld [vmem:[#allocation5 + $0x7c] sm:$0xf]
        %v2272 = vld [vmem:[#allocation5 + $0x80] sm:$0xf]
        %v2273 = vld [vmem:[#allocation5 + $0x84] sm:$0xf]
        %v2274 = vld [vmem:[#allocation5 + $0x88] sm:$0xf]
        %v2275 = vld [vmem:[#allocation5 + $0x8c] sm:$0xf]
        %v2276 = vld [vmem:[#allocation5 + $0x90] sm:$0xf]
        %v2277 = vld [vmem:[#allocation5 + $0x94] sm:$0xf]
        %v2278 = vld [vmem:[#allocation5 + $0x98] sm:$0xf]
        %v2279 = vld [vmem:[#allocation5 + $0x9c] sm:$0xf]
        %v2280 = vld [vmem:[#allocation5 + $0xa0] sm:$0xf]
        %v2281 = vld [vmem:[#allocation5 + $0xa4] sm:$0xf]
        %v2282 = vld [vmem:[#allocation5 + $0xa8] sm:$0xf]
        %v2283 = vld [vmem:[#allocation5 + $0xac] sm:$0xf]
        %v2284 = vld [vmem:[#allocation5 + $0xb0] sm:$0xf]
        %v2285 = vld [vmem:[#allocation5 + $0xb4] sm:$0xf]
        %v2286 = vld [vmem:[#allocation5 + $0xb8] sm:$0xf]
        %v2287 = vld [vmem:[#allocation5 + $0xbc] sm:$0xf]
        %v2288 = vld [vmem:[#allocation5 + $0xc0] sm:$0xf]
        %v2289 = vld [vmem:[#allocation5 + $0xc4] sm:$0xf]
        %v2290 = vld [vmem:[#allocation5 + $0xc8] sm:$0xf]
        %v2291 = vld [vmem:[#allocation5 + $0xcc] sm:$0xf]
        %v2292 = vld [vmem:[#allocation5 + $0xd0] sm:$0xf]
        %v2293 = vld [vmem:[#allocation5 + $0xd4] sm:$0xf]
        %v2294 = vld [vmem:[#allocation5 + $0xd8] sm:$0xf]
        %v2295 = vld [vmem:[#allocation5 + $0xdc] sm:$0xf]
        %v2296 = vld [vmem:[#allocation5 + $0xe0] sm:$0xf]
        %v2297 = vld [vmem:[#allocation5 + $0xe4] sm:$0xf]
        %v2298 = vld [vmem:[#allocation5 + $0xe8] sm:$0xf]
        %v2299 = vld [vmem:[#allocation5 + $0xec] sm:$0xf]
        %v2300 = vld [vmem:[#allocation5 + $0xf0] sm:$0xf]
        %v2301 = vld [vmem:[#allocation5 + $0xf4] sm:$0xf]
        %v2302 = vld [vmem:[#allocation5 + $0xf8] sm:$0xf]
        %v2303 = vld [vmem:[#allocation5 + $0xfc] sm:$0xf]
        %v2304 = vld [vmem:[#allocation5 + $0x100] sm:$0xf]
        %v2305 = vld [vmem:[#allocation5 + $0x104] sm:$0xf]
        %v2306 = vld [vmem:[#allocation5 + $0x108] sm:$0xf]
        %v2307 = vld [vmem:[#allocation5 + $0x10c] sm:$0xf]
        %v2308 = vld [vmem:[#allocation5 + $0x110] sm:$0xf]
        %v2309 = vld [vmem:[#allocation5 + $0x114] sm:$0xf]
        %v2310 = vld [vmem:[#allocation5 + $0x118] sm:$0xf]
        %v2311 = vld [vmem:[#allocation5 + $0x11c] sm:$0xf]
        %v2312 = vld [vmem:[#allocation5 + $0x120] sm:$0xf]
        %v2313 = vld [vmem:[#allocation5 + $0x124] sm:$0xf]
        %v2314 = vld [vmem:[#allocation5 + $0x128] sm:$0xf]
        %v2315 = vld [vmem:[#allocation5 + $0x12c] sm:$0xf]
        %v2316 = vld [vmem:[#allocation5 + $0x130] sm:$0xf]
        %v2317 = vld [vmem:[#allocation5 + $0x134] sm:$0xf]
        %v2318 = vld [vmem:[#allocation5 + $0x138] sm:$0xf]
        %v2319 = vld [vmem:[#allocation5 + $0x13c] sm:$0xf]
        %v2320 = vld [vmem:[%s4] sm:$0x1]
        %v2322 = vlaneseq
        %v2323 = vshrl.u32 %v2322, 7
        %v2324 = vsub.s32 0, %v2323
        %v2325 = vrot.slane %v2320, %v2324
        %v2407 = vunpack.c.l.b16 %v2240
        %v2408 = vunpack.c.l.b16 %v2241
        %v2409 = vunpack.c.l.b16 %v2242
        %v2410 = vunpack.c.l.b16 %v2243
        %v2411 = vunpack.c.l.b16 %v2244
        %v2412 = vunpack.c.l.b16 %v2245
        %v2413 = vunpack.c.l.b16 %v2246
        %v2414 = vunpack.c.l.b16 %v2247
        %v2415 = vunpack.c.l.b16 %v2248
        %v2416 = vunpack.c.l.b16 %v2249
        %v2417 = vunpack.c.l.b16 %v2250
        %v2418 = vunpack.c.l.b16 %v2251
        %v2419 = vunpack.c.l.b16 %v2252
        %v2420 = vunpack.c.l.b16 %v2253
        %v2421 = vunpack.c.l.b16 %v2254
        %v2422 = vunpack.c.l.b16 %v2255
        %v2423 = vunpack.c.l.b16 %v2256
        %v2424 = vunpack.c.l.b16 %v2257
        %v2425 = vunpack.c.l.b16 %v2258
        %v2426 = vunpack.c.l.b16 %v2259
        %v2427 = vunpack.c.l.b16 %v2260
        %v2428 = vunpack.c.l.b16 %v2261
        %v2429 = vunpack.c.l.b16 %v2262
        %v2430 = vunpack.c.l.b16 %v2263
        %v2431 = vunpack.c.l.b16 %v2264
        %v2432 = vunpack.c.l.b16 %v2265
        %v2433 = vunpack.c.l.b16 %v2266
        %v2434 = vunpack.c.l.b16 %v2267
        %v2435 = vunpack.c.l.b16 %v2268
        %v2436 = vunpack.c.l.b16 %v2269
        %v2437 = vunpack.c.l.b16 %v2270
        %v2438 = vunpack.c.l.b16 %v2271
        %v2439 = vunpack.c.l.b16 %v2272
        %v2440 = vunpack.c.l.b16 %v2273
        %v2441 = vunpack.c.l.b16 %v2274
        %v2442 = vunpack.c.l.b16 %v2275
        %v2443 = vunpack.c.l.b16 %v2276
        %v2444 = vunpack.c.l.b16 %v2277
        %v2445 = vunpack.c.l.b16 %v2278
        %v2446 = vunpack.c.l.b16 %v2279
        %v2447 = vunpack.c.l.b16 %v2280
        %v2448 = vunpack.c.l.b16 %v2281
        %v2449 = vunpack.c.l.b16 %v2282
        %v2450 = vunpack.c.l.b16 %v2283
        %v2451 = vunpack.c.l.b16 %v2284
        %v2452 = vunpack.c.l.b16 %v2285
        %v2453 = vunpack.c.l.b16 %v2286
        %v2454 = vunpack.c.l.b16 %v2287
        %v2455 = vunpack.c.l.b16 %v2288
        %v2456 = vunpack.c.l.b16 %v2289
        %v2457 = vunpack.c.l.b16 %v2290
        %v2458 = vunpack.c.l.b16 %v2291
        %v2459 = vunpack.c.l.b16 %v2292
        %v2460 = vunpack.c.l.b16 %v2293
        %v2461 = vunpack.c.l.b16 %v2294
        %v2462 = vunpack.c.l.b16 %v2295
        %v2463 = vunpack.c.l.b16 %v2296
        %v2464 = vunpack.c.l.b16 %v2297
        %v2465 = vunpack.c.l.b16 %v2298
        %v2466 = vunpack.c.l.b16 %v2299
        %v2467 = vunpack.c.l.b16 %v2300
        %v2468 = vunpack.c.l.b16 %v2301
        %v2469 = vunpack.c.l.b16 %v2302
        %v2470 = vunpack.c.l.b16 %v2303
        %v2471 = vunpack.c.l.b16 %v2304
        %v2472 = vunpack.c.l.b16 %v2305
        %v2473 = vunpack.c.l.b16 %v2306
        %v2474 = vunpack.c.l.b16 %v2307
        %v2475 = vunpack.c.l.b16 %v2308
        %v2476 = vunpack.c.l.b16 %v2309
        %v2477 = vunpack.c.l.b16 %v2310
        %v2478 = vunpack.c.l.b16 %v2311
        %v2479 = vunpack.c.l.b16 %v2312
        %v2480 = vunpack.c.l.b16 %v2313
        %v2481 = vunpack.c.l.b16 %v2314
        %v2482 = vunpack.c.l.b16 %v2315
        %v2483 = vunpack.c.l.b16 %v2316
        %v2484 = vunpack.c.l.b16 %v2317
        %v2485 = vunpack.c.l.b16 %v2318
        %v2486 = vunpack.c.l.b16 %v2319
        %v2487 = vpack.c.b16 %v2408, %v2407
        %v2488 = vpack.c.b16 %v2410, %v2409
        %v2489 = vpack.c.b16 %v2412, %v2411
        %v2490 = vpack.c.b16 %v2414, %v2413
        %v2491 = vpack.c.b16 %v2416, %v2415
        %v2492 = vpack.c.b16 %v2418, %v2417
        %v2493 = vpack.c.b16 %v2420, %v2419
        %v2494 = vpack.c.b16 %v2422, %v2421
        %v2495 = vpack.c.b16 %v2424, %v2423
        %v2496 = vpack.c.b16 %v2426, %v2425
        %v2497 = vpack.c.b16 %v2428, %v2427
        %v2498 = vpack.c.b16 %v2430, %v2429
        %v2499 = vpack.c.b16 %v2432, %v2431
        %v2500 = vpack.c.b16 %v2434, %v2433
        %v2501 = vpack.c.b16 %v2436, %v2435
        %v2502 = vpack.c.b16 %v2438, %v2437
        %v2503 = vpack.c.b16 %v2440, %v2439
        %v2504 = vpack.c.b16 %v2442, %v2441
        %v2505 = vpack.c.b16 %v2444, %v2443
        %v2506 = vpack.c.b16 %v2446, %v2445
        %v2507 = vpack.c.b16 %v2448, %v2447
        %v2508 = vpack.c.b16 %v2450, %v2449
        %v2509 = vpack.c.b16 %v2452, %v2451
        %v2510 = vpack.c.b16 %v2454, %v2453
        %v2511 = vpack.c.b16 %v2456, %v2455
        %v2512 = vpack.c.b16 %v2458, %v2457
        %v2513 = vpack.c.b16 %v2460, %v2459
        %v2514 = vpack.c.b16 %v2462, %v2461
        %v2515 = vpack.c.b16 %v2464, %v2463
        %v2516 = vpack.c.b16 %v2466, %v2465
        %v2517 = vpack.c.b16 %v2468, %v2467
        %v2518 = vpack.c.b16 %v2470, %v2469
        %v2519 = vpack.c.b16 %v2472, %v2471
        %v2520 = vpack.c.b16 %v2474, %v2473
        %v2521 = vpack.c.b16 %v2476, %v2475
        %v2522 = vpack.c.b16 %v2478, %v2477
        %v2523 = vpack.c.b16 %v2480, %v2479
        %v2524 = vpack.c.b16 %v2482, %v2481
        %v2525 = vpack.c.b16 %v2484, %v2483
        %v2526 = vpack.c.b16 %v2486, %v2485
        %2567 = vmatprep.subr.bf16.mxu0 0
        %2568 = vmatpush1.bf16.msra.mxu0 %v2487
        %2569 = vmatprep.subr.bf16.mxu0 0
        %2570 = vmatpush1.bf16.msra.mxu0 %v2488
        %2571 = vmatprep.subr.bf16.mxu0 0
        %2572 = vmatpush1.bf16.msra.mxu0 %v2489
        %2573 = vmatprep.subr.bf16.mxu0 0
        %2574 = vmatpush1.bf16.msra.mxu0 %v2490
        %2575 = vmatprep.subr.bf16.mxu0 0
        %2576 = vmatpush1.bf16.msra.mxu0 %v2491
        %2577 = vmatprep.subr.bf16.mxu0 0
        %2578 = vmatpush1.bf16.msra.mxu0 %v2492
        %2579 = vmatprep.subr.bf16.mxu0 0
        %2580 = vmatpush1.bf16.msra.mxu0 %v2493
        %2581 = vmatprep.subr.bf16.mxu0 0
        %2582 = vmatpush1.bf16.msra.mxu0 %v2494
        %2583 = vmatprep.subr.bf16.mxu0 0
        %2584 = vmatpush1.bf16.msra.mxu0 %v2495
        %2585 = vmatprep.subr.bf16.mxu0 0
        %2586 = vmatpush1.bf16.msra.mxu0 %v2496
        %2587 = vmatprep.subr.bf16.mxu0 0
        %2588 = vmatpush1.bf16.msra.mxu0 %v2497
        %2589 = vmatprep.subr.bf16.mxu0 0
        %2590 = vmatpush1.bf16.msra.mxu0 %v2498
        %2591 = vmatprep.subr.bf16.mxu0 0
        %2592 = vmatpush1.bf16.msra.mxu0 %v2499
        %2593 = vmatprep.subr.bf16.mxu0 0
        %2594 = vmatpush1.bf16.msra.mxu0 %v2500
        %2595 = vmatprep.subr.bf16.mxu0 0
        %2596 = vmatpush1.bf16.msra.mxu0 %v2501
        %2597 = vmatprep.subr.bf16.mxu0 0
        %2598 = vmatpush1.bf16.msra.mxu0 %v2502
        %2599 = vmatprep.mubr.bf16.mxu0 %v2229
        %2600 = vmatmul.mubr.bf16.gmra.mrb[0].mxu0 %v2220
        %v2601 = vpop.f32.mrb[0].mxu0
        %v2602 = vadd.f32 %v2325, %v2601
        %v2603 = vpop.f32.mrb[0].mxu0
        %v2604 = vpop.f32.mrb[0].mxu0
        %v2605 = vadd.f32 %v2325, %v2604
        %v2606 = vpop.f32.mrb[0].mxu0
        %2607 = vmatprep.mubr.bf16.mxu0 %v2207
        %2608 = vmatmul.mubr.bf16.gmra.mrb[0].mxu0 %v2229
        %v2609 = vpop.f32.mrb[0].mxu0
        %v2610 = vadd.f32 %v2325, %v2609
        %v2611 = vpop.f32.mrb[0].mxu0
        %v2612 = vpop.f32.mrb[0].mxu0
        %v2613 = vadd.f32 %v2325, %v2612
        %v2614 = vpop.f32.mrb[0].mxu0
        %2615 = vdwg.mxu0
        %2616 = vmatprep.subr.bf16.mxu0 0
        %2617 = vmatpush1.bf16.msra.mxu0 %v2503
        %2618 = vmatprep.subr.bf16.mxu0 0
        %2619 = vmatpush1.bf16.msra.mxu0 %v2504
        %2620 = vmatprep.subr.bf16.mxu0 0
        %2621 = vmatpush1.bf16.msra.mxu0 %v2505
        %2622 = vmatprep.subr.bf16.mxu0 0
        %2623 = vmatpush1.bf16.msra.mxu0 %v2506
        %2624 = vmatprep.subr.bf16.mxu0 0
        %2625 = vmatpush1.bf16.msra.mxu0 %v2507
        %2626 = vmatprep.subr.bf16.mxu0 0
        %2627 = vmatpush1.bf16.msra.mxu0 %v2508
        %2628 = vmatprep.subr.bf16.mxu0 0
        %2629 = vmatpush1.bf16.msra.mxu0 %v2509
        %2630 = vmatprep.subr.bf16.mxu0 0
        %2631 = vmatpush1.bf16.msra.mxu0 %v2510
        %2632 = vmatprep.subr.bf16.mxu0 0
        %2633 = vmatpush1.bf16.msra.mxu0 %v2511
        %2634 = vmatprep.subr.bf16.mxu0 0
        %2635 = vmatpush1.bf16.msra.mxu0 %v2512
        %2636 = vmatprep.subr.bf16.mxu0 0
        %2637 = vmatpush1.bf16.msra.mxu0 %v2513
        %2638 = vmatprep.subr.bf16.mxu0 0
        %2639 = vmatpush1.bf16.msra.mxu0 %v2514
        %2640 = vmatprep.subr.bf16.mxu0 0
        %2641 = vmatpush1.bf16.msra.mxu0 %v2515
        %2642 = vmatprep.subr.bf16.mxu0 0
        %2643 = vmatpush1.bf16.msra.mxu0 %v2516
        %2644 = vmatprep.subr.bf16.mxu0 0
        %2645 = vmatpush1.bf16.msra.mxu0 %v2517
        %2646 = vmatprep.subr.bf16.mxu0 0
        %2647 = vmatpush1.bf16.msra.mxu0 %v2518
        %2648 = vmatprep.mubr.bf16.mxu0 %v2208
        %2649 = vmatmul.mubr.bf16.gmra.mrb[0].mxu0 %v2207
        %v2650 = vpop.f32.mrb[0].mxu0
        %v2651 = vadd.f32 %v2602, %v2650
        %v2652 = vpop.f32.mrb[0].mxu0
        %v2653 = vpop.f32.mrb[0].mxu0
        %v2654 = vadd.f32 %v2605, %v2653
        %v2655 = vpop.f32.mrb[0].mxu0
        %2656 = vmatprep.mubr.bf16.mxu0 %v2235
        %2657 = vmatmul.mubr.bf16.gmra.mrb[0].mxu0 %v2208
        %v2658 = vpop.f32.mrb[0].mxu0
        %v2659 = vadd.f32 %v2610, %v2658
        %v2660 = vpop.f32.mrb[0].mxu0
        %v2661 = vpop.f32.mrb[0].mxu0
        %v2662 = vadd.f32 %v2613, %v2661
        %v2663 = vpop.f32.mrb[0].mxu0
        %2664 = vdwg.mxu0
        %2665 = vmatprep.subr.bf16.mxu0 0
        %2666 = vmatpush1.bf16.msra.mxu0 %v2519
        %2667 = vmatprep.subr.bf16.mxu0 0
        %2668 = vmatpush1.bf16.msra.mxu0 %v2520
        %2669 = vmatprep.subr.bf16.mxu0 0
        %2670 = vmatpush1.bf16.msra.mxu0 %v2521
        %2671 = vmatprep.subr.bf16.mxu0 0
        %2672 = vmatpush1.bf16.msra.mxu0 %v2522
        %2673 = vmatprep.subr.bf16.mxu0 0
        %2674 = vmatpush1.bf16.msra.mxu0 %v2523
        %2675 = vmatprep.subr.bf16.mxu0 0
        %2676 = vmatpush1.bf16.msra.mxu0 %v2524
        %2677 = vmatprep.subr.bf16.mxu0 0
        %2678 = vmatpush1.bf16.msra.mxu0 %v2525
        %2679 = vmatprep.subr.bf16.mxu0 0
        %2680 = vmatpush1.bf16.msra.mxu0 %v2526
        %2681 = vmatprep.subr.bf16.mxu0 0
        %2682 = vmatpush1.bf16.msra.mxu0 0
        %2683 = vmatprep.subr.bf16.mxu0 0
        %2684 = vmatpush1.bf16.msra.mxu0 0
        %2685 = vmatprep.subr.bf16.mxu0 0
        %2686 = vmatpush1.bf16.msra.mxu0 0
        %2687 = vmatprep.subr.bf16.mxu0 0
        %2688 = vmatpush1.bf16.msra.mxu0 0
        %2689 = vmatprep.subr.bf16.mxu0 0
        %2690 = vmatpush1.bf16.msra.mxu0 0
        %2691 = vmatprep.subr.bf16.mxu0 0
        %2692 = vmatpush1.bf16.msra.mxu0 0
        %2693 = vmatprep.subr.bf16.mxu0 0
        %2694 = vmatpush1.bf16.msra.mxu0 0
        %2695 = vmatprep.subr.bf16.mxu0 0
        %2696 = vmatpush1.bf16.msra.mxu0 0
        %2697 = vmatprep.mubr.bf16.mxu0 0
        %2698 = vmatmul.mubr.bf16.gmra.mrb[0].mxu0 %v2235
        %v2699 = vpop.f32.mrb[0].mxu0
        %v2700 = vadd.f32 %v2651, %v2699
        %v2701 = vpop.f32.mrb[0].mxu0
        %v2702 = vpop.f32.mrb[0].mxu0
        %v2703 = vadd.f32 %v2654, %v2702
        %v2704 = vpop.f32.mrb[0].mxu0
        %2705 = vmatprep.mubr.bf16.mxu0 0
        %2706 = vmatmul.mubr.bf16.gmra.mrb[0].mxu0 %v2239
        %v2707 = vpop.f32.mrb[0].mxu0
        %v2708 = vadd.f32 %v2659, %v2707
        %v2709 = vpop.f32.mrb[0].mxu0
        %v2710 = vpop.f32.mrb[0].mxu0
        %v2711 = vadd.f32 %v2662, %v2710
        %v2712 = vpop.f32.mrb[0].mxu0
        %2713 = vdwg.mxu0
        %v2714 = vpack.c.bf16 %v2703, %v2700
        %v2715 = vpack.c.bf16 %v2711, %v2708
        %v2716 = vld [vmem:[%s5] sm:$0xf]
        %v2717 = vld [vmem:[%s5 + $0x4] sm:$0xf]
        %v2718 = vld [vmem:[%s5 + $0x8] sm:$0xf]
        %v2719 = vld [vmem:[%s5 + $0xc] sm:$0xf]
        %v2720 = vld [vmem:[%s5 + $0x10] sm:$0xf]
        %v2721 = vld [vmem:[%s5 + $0x14] sm:$0xf]
        %v2722 = vld [vmem:[%s5 + $0x18] sm:$0xf]
        %v2723 = vld [vmem:[%s5 + $0x1c] sm:$0xf]
        %v2724 = vld [vmem:[%s5 + $0x20] sm:$0xf]
        %v2725 = vld [vmem:[%s5 + $0x24] sm:$0xf]
        %v2726 = vld [vmem:[%s5 + $0x28] sm:$0xf]
        %v2727 = vld [vmem:[%s5 + $0x2c] sm:$0xf]
        %v2728 = vld [vmem:[%s5 + $0x30] sm:$0xf]
        %v2729 = vld [vmem:[%s5 + $0x34] sm:$0xf]
        %v2730 = vld [vmem:[%s5 + $0x38] sm:$0xf]
        %v2731 = vld [vmem:[%s5 + $0x3c] sm:$0xf]
        %v2732 = vld [vmem:[%s6] sm:$0x1]
        %v2734 = vlaneseq
        %v2735 = vshrl.u32 %v2734, 7
        %v2736 = vsub.s32 0, %v2735
        %v2737 = vrot.slane %v2732, %v2736
        %v2755 = vunpack.c.l.b16 %v2716
        %v2756 = vunpack.c.l.b16 %v2717
        %v2757 = vunpack.c.l.b16 %v2718
        %v2758 = vunpack.c.l.b16 %v2719
        %v2759 = vunpack.c.l.b16 %v2720
        %v2760 = vunpack.c.l.b16 %v2721
        %v2761 = vunpack.c.l.b16 %v2722
        %v2762 = vunpack.c.l.b16 %v2723
        %v2763 = vunpack.c.l.b16 %v2724
        %v2764 = vunpack.c.l.b16 %v2725
        %v2765 = vunpack.c.l.b16 %v2726
        %v2766 = vunpack.c.l.b16 %v2727
        %v2767 = vunpack.c.l.b16 %v2728
        %v2768 = vunpack.c.l.b16 %v2729
        %v2769 = vunpack.c.l.b16 %v2730
        %v2770 = vunpack.c.l.b16 %v2731
        %v2771 = vpack.c.b16 %v2756, %v2755
        %v2772 = vpack.c.b16 %v2758, %v2757
        %v2773 = vpack.c.b16 %v2760, %v2759
        %v2774 = vpack.c.b16 %v2762, %v2761
        %v2775 = vpack.c.b16 %v2764, %v2763
        %v2776 = vpack.c.b16 %v2766, %v2765
        %v2777 = vpack.c.b16 %v2768, %v2767
        %v2778 = vpack.c.b16 %v2770, %v2769
        %2787 = vmatprep.subr.bf16.mxu0 0
        %2788 = vmatpush1.bf16.msra.mxu0 %v2771
        %2789 = vmatprep.subr.bf16.mxu0 0
        %2790 = vmatpush1.bf16.msra.mxu0 %v2772
        %2791 = vmatprep.subr.bf16.mxu0 0
        %2792 = vmatpush1.bf16.msra.mxu0 %v2773
        %2793 = vmatprep.subr.bf16.mxu0 0
        %2794 = vmatpush1.bf16.msra.mxu0 %v2774
        %2795 = vmatprep.subr.bf16.mxu0 0
        %2796 = vmatpush1.bf16.msra.mxu0 %v2775
        %2797 = vmatprep.subr.bf16.mxu0 0
        %2798 = vmatpush1.bf16.msra.mxu0 %v2776
        %2799 = vmatprep.subr.bf16.mxu0 0
        %2800 = vmatpush1.bf16.msra.mxu0 %v2777
        %2801 = vmatprep.subr.bf16.mxu0 0
        %2802 = vmatpush1.bf16.msra.mxu0 %v2778
        %2803 = vmatprep.subr.bf16.mxu0 0
        %2804 = vmatpush1.bf16.msra.mxu0 0
        %2805 = vmatprep.subr.bf16.mxu0 0
        %2806 = vmatpush1.bf16.msra.mxu0 0
        %2807 = vmatprep.subr.bf16.mxu0 0
        %2808 = vmatpush1.bf16.msra.mxu0 0
        %2809 = vmatprep.subr.bf16.mxu0 0
        %2810 = vmatpush1.bf16.msra.mxu0 0
        %2811 = vmatprep.subr.bf16.mxu0 0
        %2812 = vmatpush1.bf16.msra.mxu0 0
        %2813 = vmatprep.subr.bf16.mxu0 0
        %2814 = vmatpush1.bf16.msra.mxu0 0
        %2815 = vmatprep.subr.bf16.mxu0 0
        %2816 = vmatpush1.bf16.msra.mxu0 0
        %2817 = vmatprep.subr.bf16.mxu0 0
        %2818 = vmatpush1.bf16.msra.mxu0 0
        %2819 = vmatprep.mubr.bf16.mxu0 0
        %2820 = vmatmul.mubr.bf16.gmra.mrb[0].mxu0 %v2714
        %v2821 = vpop.f32.mrb[0].mxu0
        %v2822 = vadd.f32 %v2737, %v2821
        %v2823 = vpop.f32.mrb[0].mxu0
        %v2824 = vpop.f32.mrb[0].mxu0
        %v2825 = vadd.f32 %v2737, %v2824
        %v2826 = vpop.f32.mrb[0].mxu0
        %2827 = vmatprep.mubr.bf16.mxu0 0
        %2828 = vmatmul.mubr.bf16.gmra.mrb[0].mxu0 %v2715
        %v2829 = vpop.f32.mrb[0].mxu0
        %v2830 = vadd.f32 %v2737, %v2829
        %v2831 = vpop.f32.mrb[0].mxu0
        %v2832 = vpop.f32.mrb[0].mxu0
        %v2833 = vadd.f32 %v2737, %v2832
        %v2834 = vpop.f32.mrb[0].mxu0
        %2835 = vdwg.mxu0
        %2836 = vst [vmem:[%s301] sm:$0xff] %v2822
        %2837 = vst [vmem:[%s301 + $0x8] sm:$0xff] %v2825
        %s2838 = scalar_lea.vmem %s301, 16 [#allocation7]
        %2839 = vst [vmem:[%s2838] sm:$0xff] %v2830
        %2840 = vst [vmem:[%s2838 + $0x8] sm:$0xff] %v2833
        %s2841 = sand.u32 %s183, 1
        %s2842 = scalar_lea.sflag [#allocation4], %s2841
        %s2843 = sand.u32 %s183, 1
        %s2844 = smul.addr %s2843, 32
        %s2845 = scalar_lea.vmem [#allocation7], %s2844
        // Predicated region
        $region57: #{tpu_custom_call.1} parent=47 // pred_check
          %p2846 = pneg %p193
        $region58: #{tpu_custom_call.1} parent=47 // pred_check_branch
          %2848 = sbr.rel (%p2846) target = $region60
        $region59: #{tpu_custom_call.1} parent=47 // pred_region
          %s2850 = ssub.s32 512, 512
          %2851 = vsyncadd %s2842, %s2850
          %s2852 = smul.addr %s23, 4
          %s2853 = smul.addr %s2852, 128
          %s2854 = scalar_lea.hbm %s7, %s2853
          %s2855 = sshll.u32 %s2845, 4
          %s2856 = int_to_ptr.vmem [resolvable:$true] %s2855
          %2861 = dma.vmem_to_hbm [thread:$0]  %s2856, 512, %s2854, %s2842, 128, 128, 8
        $region60: #{tpu_custom_call.1} parent=47 // pred_fallthru
          _
      $region48: #{tpu_custom_call.1} parent=5 // pred_fallthru
        _
      %p2862 = scmp.le.s32.totalorder 2, %s18
      // Predicated region
      $region61: #{tpu_custom_call.1} parent=5 // pred_check
        %p2863 = pneg %p2862
      $region62: #{tpu_custom_call.1} parent=5 // pred_check_branch
        %2865 = sbr.rel (%p2863) target = $region64
      $region63: #{tpu_custom_call.1} parent=5 // pred_region
        %s2866 = ssub.s32 %s18, 2
        // Predicated region
        $region65: #{tpu_custom_call.1} parent=63 // pred_check
          %p2867 = pneg %p199
        $region66: #{tpu_custom_call.1} parent=63 // pred_check_branch
          %2869 = sbr.rel (%p2867) target = $region68
        $region67: #{tpu_custom_call.1} parent=63 // pred_region
          %s2870 = sand.u32 %s184, 1
          %s2871 = scalar_lea.sflag [#allocation4], %s2870
          %s2872 = sand.u32 %s184, 1
          %s2873 = smul.addr %s2872, 32
          %s2874 = scalar_lea.vmem [#allocation7], %s2873
          %2875 = dma.done %s2871, 512
        $region68: #{tpu_custom_call.1} parent=63 // pred_fallthru
          _
      $region64: #{tpu_custom_call.1} parent=5 // pred_fallthru
        _
    $region6: #{tpu_custom_call.1} parent=1 // loop_footer
      %s22 = sadd.s32 1, %s18
    $region7: #{tpu_custom_call.1} parent=1 // loop_footer_branch
      %17 = sbr.rel target = $region3
    $region8: #{tpu_custom_call.1} parent=1 // loop_exit
      _
    %2876 = vsyncpa [#allocation3], 1
    %s2877 = scalar_lea.sflag [#allocation3], 1
    %2878 = vsyncpa %s2877, 1
    %2879 = vsyncpa [#allocation6], 1
    %2880 = vsyncpa [#allocation4], 1
    %s2881 = scalar_lea.sflag [#allocation4], 1
    %2882 = vsyncpa %s2881, 1

</llo_original>
